<compile_context>
chip_gen: v7x
topology: tpu7x:2x2x1
jax: 0.10.0
libtpu: 0.0.40
codegen_flags: <defaults>
</compile_context>

<pallas_src>
import jax
import jax.numpy as jnp
from jax.experimental import pallas as pl
from jax.experimental.pallas import tpu as pltpu


def _cdiv(a, b):
    return -(-a // b)


def _round_up(n, m):
    return ((n + m - 1) // m) * m


# Below this many packed rows, one fused XLA dot beats the fixed pallas
# dispatch + pipeline overhead on every TPU generation.
_MIN_PALLAS_PACKED_ROWS = 1024

# Double-buffered (x tile + out tile) budget: stays under v5e's 16 MiB
# default scoped-VMEM limit without raising vmem_limit_bytes.
_VMEM_TILE_BUDGET = 12 * 1024 * 1024


def _choose_tile(R, PK, PN, tile_rows):
    """Sublane-aligned row tile: big enough to amortize the ~0.35us per-step
    pipeline overhead, small enough for the VMEM budget, cdiv-split so ragged
    padding stays tiny, and >= 4 grid steps for large R (v7x dual-TC)."""
    tile_rows = max(8, _round_up(int(tile_rows), 8))
    bytes_per_row = 4 * (PK + PN)                     # f32 in + out per packed row
    max_rows_vmem = max(8, (_VMEM_TILE_BUDGET // (2 * bytes_per_row)) // 8 * 8)
    tile_rows = min(tile_rows, max_rows_vmem)
    n_tiles = _cdiv(R, tile_rows)
    if R >= 4096:
        # Parallel grid axis is sharded across 2 TensorCores on v7x; keep at
        # least 2 double-buffered steps per core.
        n_tiles = max(n_tiles, 4)
    return _round_up(_cdiv(R, n_tiles), 8)


def _linear_kernel(x_ref, w_ref, b_ref, o_ref):
    # x_ref: [TILE_R, PK]  w_ref: [PK, PN]  b_ref: [1, PN]  o_ref: [TILE_R, PN]
    acc = jnp.dot(x_ref[...], w_ref[...], preferred_element_type=jnp.float32)
    o_ref[...] = (acc + b_ref[...]).astype(o_ref.dtype)


def pose_final_linear(x2d, w_bd, b_bd, pack, *, tile_rows=2048):
    """Row-packed Linear: x2d [M, K] @ W^T + b -> [M, N].

    w_bd: [pack*K, pack*N] block-diagonal replicated weight (pack=1 means a
    plain [K, N]).  b_bd: [1, pack*N].  The pack-to-128-lane reshape keeps the
    packed result bit-identical to row-major [M, N].
    """
    M, K = x2d.shape
    PK, PN = w_bd.shape
    assert PK == pack * K
    N = PN // pack

    R = _cdiv(M, pack)                               # packed rows
    tile_r = _choose_tile(R, PK, PN, tile_rows)
    grid_m = _cdiv(R, tile_r)
    R_pad = grid_m * tile_r
    M_pad = R_pad * pack
    if M_pad != M:
        # Tiny with the adaptive tile (<= ~8*grid_m*pack rows); fuses into the
        # pallas x operand when allow_input_fusion kicks in.
        x2d = jnp.pad(x2d, ((0, M_pad - M), (0, 0)))
    xp = x2d.reshape(R_pad, PK)                      # free row-major reshape

    yp = pl.pallas_call(
        _linear_kernel,
        out_shape=jax.ShapeDtypeStruct((R_pad, PN), x2d.dtype),
        grid_spec=pltpu.PrefetchScalarGridSpec(
            num_scalar_prefetch=0,
            grid=(grid_m,),
            in_specs=[
                pl.BlockSpec((tile_r, PK), lambda i: (i, 0)),   # streamed x
                pl.BlockSpec((PK, PN), lambda i: (0, 0)),       # resident W
                pl.BlockSpec((1, PN), lambda i: (0, 0)),        # resident b
            ],
            out_specs=pl.BlockSpec((tile_r, PN), lambda i: (i, 0)),
        ),
        compiler_params=pltpu.CompilerParams(
            dimension_semantics=(pltpu.PARALLEL,),     # megacore split on v7x
            # Allow XLA to fuse the input-side transpose / tail pad into the
            # kernel's x operand instead of materializing an extra HBM copy.
            allow_input_fusion=[True, False, False],
        ),
        cost_estimate=pl.CostEstimate(
            flops=2 * R_pad * PK * PN,                 # real block-diagonal work
            transcendentals=0,
            bytes_accessed=4 * (R_pad * PK + PK * PN + PN + R_pad * PN),
        ),
    )(xp, w_bd, b_bd)

    # [R_pad, pack*N] is bit-identical to [M_pad, N] row-major; drop padding.
    return yp.reshape(M_pad, N)[:M]


class OutputProcessPallas:
    """JAX/Pallas port of OutputProcess(out_feats, latent_dim):
    y = Linear(x); y.permute(1, 0, 2) -- the permute is applied on the input
    side so the kernel output is already [batch, seq, out_feats]."""

    def __init__(self, out_feats=263, latent_dim=512, key=None,
                 tile_rows=2048, force_pallas=False):
        self.out_feats = out_feats
        self.latent_dim = latent_dim
        self.tile_rows = tile_rows
        self.force_pallas = force_pallas
        if key is None:
            key = jax.random.PRNGKey(42)
        kw, kb = jax.random.split(key)
        # Deterministic synthetic init matching nn.Linear's parameter shapes:
        # weight [out_feats, latent_dim], bias [out_feats].
        bound = 1.0 / (latent_dim ** 0.5)
        weight = jax.random.uniform(
            kw, (out_feats, latent_dim), jnp.float32, -bound, bound)
        bias = jax.random.uniform(kb, (out_feats,), jnp.float32, -bound, bound)
        self.weight = weight
        self.bias = bias

        # Lane-dense packing factor: pack 128//K logical rows per physical
        # 128-lane row when K divides 128; otherwise plain [K, N] weight.
        K, F = latent_dim, out_feats
        pack = 128 // K if (K < 128 and 128 % K == 0) else 1
        self.pack = pack

        w_t = weight.T                                   # [K, F]
        if pack > 1:
            w_bd = jnp.zeros((pack * K, pack * F), jnp.float32)
            for p in range(pack):
                w_bd = w_bd.at[p * K:(p + 1) * K, p * F:(p + 1) * F].set(w_t)
            b_bd = jnp.tile(bias.reshape(1, F), (1, pack))
        else:
            w_bd = w_t
            b_bd = bias.reshape(1, F)
        self.w_bd = w_bd
        self.b_bd = b_bd

    def __call__(self, x):
        # x: [seq, batch, K].  Transpose the (smaller) input instead of the
        # (larger) output so no post-kernel transpose HBM pass is needed.
        S, B, K = x.shape
        x2d = jnp.transpose(x, (1, 0, 2)).reshape(B * S, K)
        R = _cdiv(B * S, self.pack)
        if self.force_pallas or R >= _MIN_PALLAS_PACKED_ROWS:
            y2d = pose_final_linear(x2d, self.w_bd, self.b_bd, self.pack,
                                    tile_rows=self.tile_rows)
        else:
            # Small-problem fallback: a single fused XLA dot beats the fixed
            # pallas dispatch + pipeline overhead at these sizes.
            y2d = x2d @ self.weight.T + self.bias
        return y2d.reshape(B, S, self.out_feats)


def _reference(x, weight, bias):
    y = jnp.einsum("sbk,ok->sbo", x, weight) + bias
    return jnp.transpose(y, (1, 0, 2))


if __name__ == "__main__":
    key = jax.random.PRNGKey(0)
    k1, k2, k3, kp1, kp2 = jax.random.split(key, 5)

    # 1) Small demo shape [seq, batch, latent_dim] (auto -> XLA fallback path).
    seq, batch, latent_dim, out_feats = 8, 2, 32, 64
    x_small = jax.random.normal(k1, (seq, batch, latent_dim), jnp.float32)
    mod = OutputProcessPallas(out_feats=out_feats, latent_dim=latent_dim, key=kp1)
    out_small = jax.block_until_ready(mod(x_small))
    ref_small = _reference(x_small, mod.weight, mod.bias)
    assert out_small.shape == (batch, seq, out_feats), out_small.shape
    assert jnp.allclose(out_small, ref_small, atol=1e-3, rtol=1e-3)

    # 2) Larger shape exercising the packed Pallas path with a multi-step grid.
    seq2, batch2 = 8192, 2
    x_big = jax.random.normal(k2, (seq2, batch2, latent_dim), jnp.float32)
    out_big = jax.block_until_ready(mod(x_big))
    ref_big = _reference(x_big, mod.weight, mod.bias)
    assert out_big.shape == (batch2, seq2, out_feats), out_big.shape
    assert jnp.allclose(out_big, ref_big, atol=1e-3, rtol=1e-3)

    # 3) Module defaults (latent_dim=512, out_feats=263): pack=1 path, forced
    #    through the Pallas kernel at a small size.
    mod_def = OutputProcessPallas(out_feats=263, latent_dim=512, key=kp2,
                                  force_pallas=True)
    x_def = jax.random.normal(k3, (64, 4, 512), jnp.float32)
    out_def = jax.block_until_ready(mod_def(x_def))
    ref_def = _reference(x_def, mod_def.weight, mod_def.bias)
    assert out_def.shape == (4, 64, 263), out_def.shape
    assert jnp.allclose(out_def, ref_def, atol=5e-3, rtol=5e-3)

    print("KERNEL_OK")
</pallas_src>

<mosaic_0001>
module attributes {stable_mosaic.version = 11 : i64} {
  func.func @_linear_kernel(%arg0: i32, %arg1: memref<1024x128xf32, #tpu.memory_space<vmem>>, %arg2: memref<128x256xf32, #tpu.memory_space<vmem>>, %arg3: memref<1x256xf32, #tpu.memory_space<vmem>>, %arg4: memref<1024x256xf32, #tpu.memory_space<vmem>>) attributes {dimension_semantics = [#tpu.dimension_semantics<parallel>], iteration_bounds = array<i64: 4>, scalar_prefetch = 0 : i64, scratch_operands = 0 : i64, tpu.core_type = #tpu.core_type<tc>, window_params = [{transform_indices = @transform_0, window_bounds = array<i64: 1024, 128>}, {pipeline_mode = #tpu.pipeline_mode<synchronous>, transform_indices = @transform_1, window_bounds = array<i64: 128, 256>}, {pipeline_mode = #tpu.pipeline_mode<synchronous>, transform_indices = @transform_2, window_bounds = array<i64: 1, 256>}, {transform_indices = @transform_3, window_bounds = array<i64: 1024, 256>}]} {
    %c0 = arith.constant 0 : index
    %c0_0 = arith.constant 0 : index
    %0 = vector.load %arg1[%c0, %c0_0] : memref<1024x128xf32, #tpu.memory_space<vmem>>, vector<1024x128xf32>
    %c0_1 = arith.constant 0 : index
    %c0_2 = arith.constant 0 : index
    %1 = vector.load %arg2[%c0_1, %c0_2] : memref<128x256xf32, #tpu.memory_space<vmem>>, vector<128x256xf32>
    %cst = arith.constant dense<0.000000e+00> : vector<1024x256xf32>
    %2 = tpu.matmul %0, %1, %cst {dimension_numbers = #tpu.dot_dimension_numbers<[1], [0], [0], [1], [0, 0, 1, 1], [], []>} : vector<1024x128xf32>, vector<128x256xf32>, vector<1024x256xf32> -> vector<1024x256xf32>
    %c0_3 = arith.constant 0 : index
    %c0_4 = arith.constant 0 : index
    %3 = vector.load %arg3[%c0_3, %c0_4] : memref<1x256xf32, #tpu.memory_space<vmem>>, vector<1x256xf32>
    %4 = vector.broadcast %3 : vector<1x256xf32> to vector<1024x256xf32>
    %5 = arith.addf %2, %4 : vector<1024x256xf32>
    %c0_5 = arith.constant 0 : index
    %c0_6 = arith.constant 0 : index
    %6 = vector.load %arg4[%c0_5, %c0_6] : memref<1024x256xf32, #tpu.memory_space<vmem>>, vector<1024x256xf32>
    tpu.vector_store %arg4[%c0_5, %c0_6], %5 {strides = array<i32>} : memref<1024x256xf32, #tpu.memory_space<vmem>>, vector<1024x256xf32>,
    return
  }
  func.func @transform_0(%arg0: i32) -> (i32, i32) {
    %c0_i32 = arith.constant 0 : i32
    %c0_i32_0 = arith.constant 0 : i32
    return %arg0, %c0_i32 : i32, i32
  }
  func.func @transform_1(%arg0: i32) -> (i32, i32) {
    %c0_i32 = arith.constant 0 : i32
    %c0_i32_0 = arith.constant 0 : i32
    %c0_i32_1 = arith.constant 0 : i32
    return %c0_i32, %c0_i32_0 : i32, i32
  }
  func.func @transform_2(%arg0: i32) -> (i32, i32) {
    %c0_i32 = arith.constant 0 : i32
    %c0_i32_0 = arith.constant 0 : i32
    %c0_i32_1 = arith.constant 0 : i32
    return %c0_i32, %c0_i32_0 : i32, i32
  }
  func.func @transform_3(%arg0: i32) -> (i32, i32) {
    %c0_i32 = arith.constant 0 : i32
    %c0_i32_0 = arith.constant 0 : i32
    return %arg0, %c0_i32 : i32, i32
  }
}

</mosaic_0001>

<llo_original>
// kernel: tpu_custom_call.1
$region0: #{tpu_custom_call.1}
  #allocation0 [shape = 'u32[]', space=smem, size = 0x4, offset = 0x4, fixed_abs, tag = 'smem constant byte address 0x4 - core index']
  #allocation1 [shape = 'u32[144,128]{1,0:T(1,128)}', space=vmem, size = 0x12000, scoped, tag = 'internal scratch']
  %s0 = inlined_call_operand.hbm [shape: f32[4096,128], index: 0, kind: input, shape index: {}]
  %s1 = inlined_call_operand.hbm [shape: f32[128,256], index: 1, kind: input, shape index: {}]
  %s2 = inlined_call_operand.hbm [shape: f32[1,256], index: 2, kind: input, shape index: {}]
  %s3 = inlined_call_operand.hbm [shape: f32[4096,256], index: 3, kind: output, shape index: {}]
  %s4 = sld [smem:[#allocation0]]
  $region57: #{tpu_custom_call.1} parent=0
    _
  %s6 = ssub.s32 1, %s4
  %s7 = scalar_select 0, %s6, %s4
  $region1: #{tpu_custom_call.1} parent=0
    #allocation2 [shape = 'u8[1048576]{0}', space=vmem, size = 0x100000, scoped, tag = 'input window, operand 0']
    #allocation3 [shape = 's32[2]{0}', space=sflag, size = 0x8, scoped, tag = 'scoped memory for tpu_custom_call.1']
    #allocation4 [shape = 's32[2]{0}', space=sflag, size = 0x8, scoped, tag = 'scoped memory for tpu_custom_call.1']
    #allocation5 [shape = 'u8[131072]{0}', space=vmem, size = 0x20000, scoped, tag = 'input window, operand 1, single buffered']
    #allocation6 [shape = 's32[1]{0}', space=sflag, size = 0x4, scoped, tag = 'scoped memory for tpu_custom_call.1']
    #allocation7 [shape = 'u8[1024]{0}', space=vmem, size = 0x400, scoped, tag = 'input window, operand 2, single buffered']
    #allocation8 [shape = 'u8[2097152]{0}', space=vmem, size = 0x200000, scoped, tag = 'output window, operand 0']
    %8 = vsyncpa [#allocation3], 0
    %s9 = scalar_lea.sflag [#allocation3], 1
    %10 = vsyncpa %s9, 0
    %11 = vsyncpa [#allocation6], 0
    %12 = vsyncpa [#allocation4], 0
    %s13 = scalar_lea.sflag [#allocation4], 1
    %14 = vsyncpa %s13, 0
    loop: start=0, step=1, limit=6
    $region2: #{tpu_custom_call.1} parent=1 // loop_pre_header
      _
    $region3: #{tpu_custom_call.1} parent=1 // loop_header
      %s16 = sphi 0, %s20
      %p17 = scmp.ge.s32.totalorder %s16, 6
      %s26 = sphi 0, %s28
      %s29 = sphi 0, %s26
      %s30 = sphi 0, %s29
      %s46 = sphi 0, %s30
      %s50 = sphi 0, %s50
      %s52 = sphi 0, %s50
      %s53 = sphi 0, %s52
      %s67 = sphi 0, %s53
      %s71 = sphi 0, %s71
      %s73 = sphi 0, %s71
      %s74 = sphi 0, %s73
      %s88 = sphi 0, %s74
      %s94 = sphi 0, %s96
      %s97 = sphi 0, %s94
      %s98 = sphi 0, %s97
      %s114 = sphi 0, %s98
    $region4: #{tpu_custom_call.1} parent=1 // loop_header_branch
      %19 = sbr.rel (%p17) target = $region8
    $region5: #{tpu_custom_call.1} parent=1 // loop_body
      %s21 = ssub.s32 %s16, 1
      %s22 = ssub.s32 %s16, 2
      %s23 = sadd.s32 %s16, 1
      %s24 = ssub.s32 %s16, %s23
      %p25 = scmp.eq.s32.totalorder %s24, 0
      %s27 = sadd.s32 %s26, 1
      %s28 = scalar_select %p25, %s26, %s27
      %p31 = pneg %p25
      %p32 = scmp.eq.s32.totalorder %s16, 3
      %p33 = por %p31, %p32
      %p34 = scmp.ne.s32.totalorder %s26, %s29
      %p35 = scmp.eq.s32.totalorder %s16, 0
      %p36 = por %p34, %p35
      %p37 = scmp.ne.s32.totalorder %s26, %s29
      %p38 = scmp.eq.s32.totalorder %s21, 3
      %p39 = por %p37, %p38
      %p40 = scmp.ne.s32.totalorder %s29, %s30
      %p41 = scmp.eq.s32.totalorder %s21, 0
      %p42 = por %p40, %p41
      %p43 = scmp.ne.s32.totalorder %s29, %s30
      %p44 = scmp.eq.s32.totalorder %s22, 3
      %p45 = por %p43, %p44
      %p47 = scmp.ne.s32.totalorder %s30, %s46
      %p48 = scmp.eq.s32.totalorder %s22, 0
      %p49 = por %p47, %p48
      %s51 = sadd.s32 %s50, 1
      %p54 = scmp.eq.s32.totalorder %s16, 3
      %p55 = scmp.ne.s32.totalorder %s50, %s52
      %p56 = scmp.eq.s32.totalorder %s16, 0
      %p57 = por %p55, %p56
      %p58 = scmp.ne.s32.totalorder %s50, %s52
      %p59 = scmp.eq.s32.totalorder %s21, 3
      %p60 = por %p58, %p59
      %p61 = scmp.ne.s32.totalorder %s52, %s53
      %p62 = scmp.eq.s32.totalorder %s21, 0
      %p63 = por %p61, %p62
      %p64 = scmp.ne.s32.totalorder %s52, %s53
      %p65 = scmp.eq.s32.totalorder %s22, 3
      %p66 = por %p64, %p65
      %p68 = scmp.ne.s32.totalorder %s53, %s67
      %p69 = scmp.eq.s32.totalorder %s22, 0
      %p70 = por %p68, %p69
      %s72 = sadd.s32 %s71, 1
      %p75 = scmp.eq.s32.totalorder %s16, 3
      %p76 = scmp.ne.s32.totalorder %s71, %s73
      %p77 = scmp.eq.s32.totalorder %s16, 0
      %p78 = por %p76, %p77
      %p79 = scmp.ne.s32.totalorder %s71, %s73
      %p80 = scmp.eq.s32.totalorder %s21, 3
      %p81 = por %p79, %p80
      %p82 = scmp.ne.s32.totalorder %s73, %s74
      %p83 = scmp.eq.s32.totalorder %s21, 0
      %p84 = por %p82, %p83
      %p85 = scmp.ne.s32.totalorder %s73, %s74
      %p86 = scmp.eq.s32.totalorder %s22, 3
      %p87 = por %p85, %p86
      %p89 = scmp.ne.s32.totalorder %s74, %s88
      %p90 = scmp.eq.s32.totalorder %s22, 0
      %p91 = por %p89, %p90
      %s92 = ssub.s32 %s16, %s23
      %p93 = scmp.eq.s32.totalorder %s92, 0
      %s95 = sadd.s32 %s94, 1
      %s96 = scalar_select %p93, %s94, %s95
      %p99 = pneg %p93
      %p100 = scmp.eq.s32.totalorder %s16, 3
      %p101 = por %p99, %p100
      %p102 = scmp.ne.s32.totalorder %s94, %s97
      %p103 = scmp.eq.s32.totalorder %s16, 0
      %p104 = por %p102, %p103
      %p105 = scmp.ne.s32.totalorder %s94, %s97
      %p106 = scmp.eq.s32.totalorder %s21, 3
      %p107 = por %p105, %p106
      %p108 = scmp.ne.s32.totalorder %s97, %s98
      %p109 = scmp.eq.s32.totalorder %s21, 0
      %p110 = por %p108, %p109
      %p111 = scmp.ne.s32.totalorder %s97, %s98
      %p112 = scmp.eq.s32.totalorder %s22, 3
      %p113 = por %p111, %p112
      %p115 = scmp.ne.s32.totalorder %s98, %s114
      %p116 = scmp.eq.s32.totalorder %s22, 0
      %p117 = por %p115, %p116
      %p118 = scmp.le.s32.totalorder 1, %s16
      %p119 = scmp.lt.s32.totalorder %s16, 5
      %p120 = pnand %p118, %p119
      %p121 = pneg %p120
      // Predicated region
      $region9: #{tpu_custom_call.1} parent=5 // pred_check
        _
      $region10: #{tpu_custom_call.1} parent=5 // pred_check_branch
        %123 = sbr.rel (%p120) target = $region12
      $region11: #{tpu_custom_call.1} parent=5 // pred_region
        %s124 = ssub.s32 %s16, 1
        // Predicated region
        $region13: #{tpu_custom_call.1} parent=11 // pred_check
          %p125 = pneg %p63
        $region14: #{tpu_custom_call.1} parent=11 // pred_check_branch
          %127 = sbr.rel (%p125) target = $region16
        $region15: #{tpu_custom_call.1} parent=11 // pred_region
          %s129 = ssub.s32 4096, 4096
          %130 = vsyncadd [#allocation6], %s129
          %s131 = sshll.u32 [#allocation5], 4
          %s132 = int_to_ptr.vmem [resolvable:$true] %s131
          %137 = dma.hbm_to_vmem [thread:$0]  %s1, 4096, %s132, [#allocation6], 256, 256, 16
        $region16: #{tpu_custom_call.1} parent=11 // pred_fallthru
          _
        // Predicated region
        $region17: #{tpu_custom_call.1} parent=11 // pred_check
          %p138 = pneg %p84
        $region18: #{tpu_custom_call.1} parent=11 // pred_check_branch
          %140 = sbr.rel (%p138) target = $region20
        $region19: #{tpu_custom_call.1} parent=11 // pred_region
          %s142 = ssub.s32 32, 32
          %143 = vsyncadd [#allocation6], %s142
          %s145 = sshll.u32 [#allocation7], 4
          %s146 = int_to_ptr.vmem [resolvable:$true] %s145
          %148 = dma.hbm_to_vmem [thread:$0]  %s2, 32, %s146, [#allocation6]
        $region20: #{tpu_custom_call.1} parent=11 // pred_fallthru
          _
      $region12: #{tpu_custom_call.1} parent=5 // pred_fallthru
        _
      %p149 = scmp.lt.s32.totalorder %s16, 4
      // Predicated region
      $region21: #{tpu_custom_call.1} parent=5 // pred_check
        %p150 = pneg %p149
      $region22: #{tpu_custom_call.1} parent=5 // pred_check_branch
        %152 = sbr.rel (%p150) target = $region24
      $region23: #{tpu_custom_call.1} parent=5 // pred_region
        // Predicated region
        $region25: #{tpu_custom_call.1} parent=23 // pred_check
          %p153 = pneg %p36
        $region26: #{tpu_custom_call.1} parent=23 // pred_check_branch
          %155 = sbr.rel (%p153) target = $region28
        $region27: #{tpu_custom_call.1} parent=23 // pred_region
          %s156 = sand.u32 %s26, 1
          %s157 = scalar_lea.sflag [#allocation3], %s156
          %s158 = sand.u32 %s26, 1
          %s159 = smul.addr %s158, 1024
          %s160 = scalar_lea.vmem [#allocation2], %s159
          %s161 = smul.u32 128, %s16
          %s163 = ssub.s32 16384, 16384
          %164 = vsyncadd %s157, %s163
          %s165 = smul.addr %s161, 128
          %s166 = scalar_lea.hbm %s0, %s165
          %s167 = sshll.u32 %s160, 4
          %s168 = int_to_ptr.vmem [resolvable:$true] %s167
          %173 = dma.hbm_to_vmem [thread:$0]  %s166, 16384, %s168, %s157, 128, 128, 8
        $region28: #{tpu_custom_call.1} parent=23 // pred_fallthru
          _
      $region24: #{tpu_custom_call.1} parent=5 // pred_fallthru
        _
      %p174 = scmp.le.s32.totalorder 1, %s16
      %p175 = scmp.lt.s32.totalorder %s16, 5
      %p176 = pnand %p174, %p175
      %p177 = pneg %p176
      // Predicated region
      $region29: #{tpu_custom_call.1} parent=5 // pred_check
        _
      $region30: #{tpu_custom_call.1} parent=5 // pred_check_branch
        %179 = sbr.rel (%p176) target = $region32
      $region31: #{tpu_custom_call.1} parent=5 // pred_region
        %s180 = ssub.s32 %s16, 1
        %s181 = sand.u32 %s29, 1
        %s182 = scalar_lea.sflag [#allocation3], %s181
        %s183 = sand.u32 %s29, 1
        %s184 = smul.addr %s183, 1024
        %s185 = scalar_lea.vmem [#allocation2], %s184
        // Predicated region
        $region33: #{tpu_custom_call.1} parent=31 // pred_check
          %p186 = pneg %p42
        $region34: #{tpu_custom_call.1} parent=31 // pred_check_branch
          %188 = sbr.rel (%p186) target = $region36
        $region35: #{tpu_custom_call.1} parent=31 // pred_region
          %189 = dma.done %s182, 16384
        $region36: #{tpu_custom_call.1} parent=31 // pred_fallthru
          _
        // Predicated region
        $region37: #{tpu_custom_call.1} parent=31 // pred_check
          %p190 = pneg %p63
        $region38: #{tpu_custom_call.1} parent=31 // pred_check_branch
          %192 = sbr.rel (%p190) target = $region40
        $region39: #{tpu_custom_call.1} parent=31 // pred_region
          %193 = dma.done [#allocation6], 4096
        $region40: #{tpu_custom_call.1} parent=31 // pred_fallthru
          _
        // Predicated region
        $region41: #{tpu_custom_call.1} parent=31 // pred_check
          %p194 = pneg %p84
        $region42: #{tpu_custom_call.1} parent=31 // pred_check_branch
          %196 = sbr.rel (%p194) target = $region44
        $region43: #{tpu_custom_call.1} parent=31 // pred_region
          %197 = dma.done [#allocation6], 32
        $region44: #{tpu_custom_call.1} parent=31 // pred_fallthru
          _
        %s198 = sand.u32 %s29, 1
        %s199 = scalar_lea.sflag [#allocation3], %s198
        %s200 = sand.u32 %s29, 1
        %s201 = smul.addr %s200, 1024
        %s202 = scalar_lea.vmem [#allocation2], %s201
        %p203 = pneg %p42
        %p204 = pneg %p39
        %p205 = pneg %p63
        %p206 = pneg %p60
        %p207 = pneg %p84
        %p208 = pneg %p81
        %p209 = pneg %p110
        %p210 = pneg %p107
        %s211 = sand.u32 %s97, 1
        %s212 = scalar_lea.sflag [#allocation4], %s211
        %s213 = sand.u32 %s97, 1
        %s214 = smul.addr %s213, 2048
        %s215 = scalar_lea.vmem [#allocation8], %s214
        %s216 = smul.u32 128, %s21
        %s217 = smul.u32 128, %s21
        %v218 = vld [vmem:[%s185] sm:$0xff]
        %v219 = vld [vmem:[%s185 + $0x8] sm:$0xff]
        %v220 = vld [vmem:[%s185 + $0x10] sm:$0xff]
        %v221 = vld [vmem:[%s185 + $0x18] sm:$0xff]
        %v222 = vld [vmem:[%s185 + $0x20] sm:$0xff]
        %v223 = vld [vmem:[%s185 + $0x28] sm:$0xff]
        %v224 = vld [vmem:[%s185 + $0x30] sm:$0xff]
        %v225 = vld [vmem:[%s185 + $0x38] sm:$0xff]
        %v226 = vld [vmem:[%s185 + $0x40] sm:$0xff]
        %v227 = vld [vmem:[%s185 + $0x48] sm:$0xff]
        %v228 = vld [vmem:[%s185 + $0x50] sm:$0xff]
        %v229 = vld [vmem:[%s185 + $0x58] sm:$0xff]
        %v230 = vld [vmem:[%s185 + $0x60] sm:$0xff]
        %v231 = vld [vmem:[%s185 + $0x68] sm:$0xff]
        %v232 = vld [vmem:[%s185 + $0x70] sm:$0xff]
        %v233 = vld [vmem:[%s185 + $0x78] sm:$0xff]
        %v234 = vld [vmem:[%s185 + $0x80] sm:$0xff]
        %v235 = vld [vmem:[%s185 + $0x88] sm:$0xff]
        %v236 = vld [vmem:[%s185 + $0x90] sm:$0xff]
        %v237 = vld [vmem:[%s185 + $0x98] sm:$0xff]
        %v238 = vld [vmem:[%s185 + $0xa0] sm:$0xff]
        %v239 = vld [vmem:[%s185 + $0xa8] sm:$0xff]
        %v240 = vld [vmem:[%s185 + $0xb0] sm:$0xff]
        %v241 = vld [vmem:[%s185 + $0xb8] sm:$0xff]
        %v242 = vld [vmem:[%s185 + $0xc0] sm:$0xff]
        %v243 = vld [vmem:[%s185 + $0xc8] sm:$0xff]
        %v244 = vld [vmem:[%s185 + $0xd0] sm:$0xff]
        %v245 = vld [vmem:[%s185 + $0xd8] sm:$0xff]
        %v246 = vld [vmem:[%s185 + $0xe0] sm:$0xff]
        %v247 = vld [vmem:[%s185 + $0xe8] sm:$0xff]
        %v248 = vld [vmem:[%s185 + $0xf0] sm:$0xff]
        %v249 = vld [vmem:[%s185 + $0xf8] sm:$0xff]
        %v250 = vld [vmem:[%s185 + $0x100] sm:$0xff]
        %v251 = vld [vmem:[%s185 + $0x108] sm:$0xff]
        %v252 = vld [vmem:[%s185 + $0x110] sm:$0xff]
        %v253 = vld [vmem:[%s185 + $0x118] sm:$0xff]
        %v254 = vld [vmem:[%s185 + $0x120] sm:$0xff]
        %v255 = vld [vmem:[%s185 + $0x128] sm:$0xff]
        %v256 = vld [vmem:[%s185 + $0x130] sm:$0xff]
        %v257 = vld [vmem:[%s185 + $0x138] sm:$0xff]
        %v258 = vld [vmem:[%s185 + $0x140] sm:$0xff]
        %v259 = vld [vmem:[%s185 + $0x148] sm:$0xff]
        %v260 = vld [vmem:[%s185 + $0x150] sm:$0xff]
        %v261 = vld [vmem:[%s185 + $0x158] sm:$0xff]
        %v262 = vld [vmem:[%s185 + $0x160] sm:$0xff]
        %v263 = vld [vmem:[%s185 + $0x168] sm:$0xff]
        %v264 = vld [vmem:[%s185 + $0x170] sm:$0xff]
        %v265 = vld [vmem:[%s185 + $0x178] sm:$0xff]
        %v266 = vld [vmem:[%s185 + $0x180] sm:$0xff]
        %v267 = vld [vmem:[%s185 + $0x188] sm:$0xff]
        %v268 = vld [vmem:[%s185 + $0x190] sm:$0xff]
        %v269 = vld [vmem:[%s185 + $0x198] sm:$0xff]
        %v270 = vld [vmem:[%s185 + $0x1a0] sm:$0xff]
        %v271 = vld [vmem:[%s185 + $0x1a8] sm:$0xff]
        %v272 = vld [vmem:[%s185 + $0x1b0] sm:$0xff]
        %v273 = vld [vmem:[%s185 + $0x1b8] sm:$0xff]
        %v274 = vld [vmem:[%s185 + $0x1c0] sm:$0xff]
        %v275 = vld [vmem:[%s185 + $0x1c8] sm:$0xff]
        %v276 = vld [vmem:[%s185 + $0x1d0] sm:$0xff]
        %v277 = vld [vmem:[%s185 + $0x1d8] sm:$0xff]
        %v278 = vld [vmem:[%s185 + $0x1e0] sm:$0xff]
        %v279 = vld [vmem:[%s185 + $0x1e8] sm:$0xff]
        %v280 = vld [vmem:[%s185 + $0x1f0] sm:$0xff]
        %v281 = vld [vmem:[%s185 + $0x1f8] sm:$0xff]
        %v282 = vld [vmem:[%s185 + $0x200] sm:$0xff]
        %v283 = vld [vmem:[%s185 + $0x208] sm:$0xff]
        %v284 = vld [vmem:[%s185 + $0x210] sm:$0xff]
        %v285 = vld [vmem:[%s185 + $0x218] sm:$0xff]
        %v286 = vld [vmem:[%s185 + $0x220] sm:$0xff]
        %v287 = vld [vmem:[%s185 + $0x228] sm:$0xff]
        %v288 = vld [vmem:[%s185 + $0x230] sm:$0xff]
        %v289 = vld [vmem:[%s185 + $0x238] sm:$0xff]
        %v290 = vld [vmem:[%s185 + $0x240] sm:$0xff]
        %v291 = vld [vmem:[%s185 + $0x248] sm:$0xff]
        %v292 = vld [vmem:[%s185 + $0x250] sm:$0xff]
        %v293 = vld [vmem:[%s185 + $0x258] sm:$0xff]
        %v294 = vld [vmem:[%s185 + $0x260] sm:$0xff]
        %v295 = vld [vmem:[%s185 + $0x268] sm:$0xff]
        %v296 = vld [vmem:[%s185 + $0x270] sm:$0xff]
        %v297 = vld [vmem:[%s185 + $0x278] sm:$0xff]
        %v298 = vld [vmem:[%s185 + $0x280] sm:$0xff]
        %v299 = vld [vmem:[%s185 + $0x288] sm:$0xff]
        %v300 = vld [vmem:[%s185 + $0x290] sm:$0xff]
        %v301 = vld [vmem:[%s185 + $0x298] sm:$0xff]
        %v302 = vld [vmem:[%s185 + $0x2a0] sm:$0xff]
        %v303 = vld [vmem:[%s185 + $0x2a8] sm:$0xff]
        %v304 = vld [vmem:[%s185 + $0x2b0] sm:$0xff]
        %v305 = vld [vmem:[%s185 + $0x2b8] sm:$0xff]
        %v306 = vld [vmem:[%s185 + $0x2c0] sm:$0xff]
        %v307 = vld [vmem:[%s185 + $0x2c8] sm:$0xff]
        %v308 = vld [vmem:[%s185 + $0x2d0] sm:$0xff]
        %v309 = vld [vmem:[%s185 + $0x2d8] sm:$0xff]
        %v310 = vld [vmem:[%s185 + $0x2e0] sm:$0xff]
        %v311 = vld [vmem:[%s185 + $0x2e8] sm:$0xff]
        %v312 = vld [vmem:[%s185 + $0x2f0] sm:$0xff]
        %v313 = vld [vmem:[%s185 + $0x2f8] sm:$0xff]
        %v314 = vld [vmem:[%s185 + $0x300] sm:$0xff]
        %v315 = vld [vmem:[%s185 + $0x308] sm:$0xff]
        %v316 = vld [vmem:[%s185 + $0x310] sm:$0xff]
        %v317 = vld [vmem:[%s185 + $0x318] sm:$0xff]
        %v318 = vld [vmem:[%s185 + $0x320] sm:$0xff]
        %v319 = vld [vmem:[%s185 + $0x328] sm:$0xff]
        %v320 = vld [vmem:[%s185 + $0x330] sm:$0xff]
        %v321 = vld [vmem:[%s185 + $0x338] sm:$0xff]
        %v322 = vld [vmem:[%s185 + $0x340] sm:$0xff]
        %v323 = vld [vmem:[%s185 + $0x348] sm:$0xff]
        %v324 = vld [vmem:[%s185 + $0x350] sm:$0xff]
        %v325 = vld [vmem:[%s185 + $0x358] sm:$0xff]
        %v326 = vld [vmem:[%s185 + $0x360] sm:$0xff]
        %v327 = vld [vmem:[%s185 + $0x368] sm:$0xff]
        %v328 = vld [vmem:[%s185 + $0x370] sm:$0xff]
        %v329 = vld [vmem:[%s185 + $0x378] sm:$0xff]
        %v330 = vld [vmem:[%s185 + $0x380] sm:$0xff]
        %v331 = vld [vmem:[%s185 + $0x388] sm:$0xff]
        %v332 = vld [vmem:[%s185 + $0x390] sm:$0xff]
        %v333 = vld [vmem:[%s185 + $0x398] sm:$0xff]
        %v334 = vld [vmem:[%s185 + $0x3a0] sm:$0xff]
        %v335 = vld [vmem:[%s185 + $0x3a8] sm:$0xff]
        %v336 = vld [vmem:[%s185 + $0x3b0] sm:$0xff]
        %v337 = vld [vmem:[%s185 + $0x3b8] sm:$0xff]
        %v338 = vld [vmem:[%s185 + $0x3c0] sm:$0xff]
        %v339 = vld [vmem:[%s185 + $0x3c8] sm:$0xff]
        %v340 = vld [vmem:[%s185 + $0x3d0] sm:$0xff]
        %v341 = vld [vmem:[%s185 + $0x3d8] sm:$0xff]
        %v342 = vld [vmem:[%s185 + $0x3e0] sm:$0xff]
        %v343 = vld [vmem:[%s185 + $0x3e8] sm:$0xff]
        %v344 = vld [vmem:[%s185 + $0x3f0] sm:$0xff]
        %v345 = vld [vmem:[%s185 + $0x3f8] sm:$0xff]
        %v346 = vld [vmem:[#allocation5] sm:$0xff]
        %v347 = vld [vmem:[#allocation5 + $0x8] sm:$0xff]
        %v348 = vld [vmem:[#allocation5 + $0x10] sm:$0xff]
        %v349 = vld [vmem:[#allocation5 + $0x18] sm:$0xff]
        %v350 = vld [vmem:[#allocation5 + $0x20] sm:$0xff]
        %v351 = vld [vmem:[#allocation5 + $0x28] sm:$0xff]
        %v352 = vld [vmem:[#allocation5 + $0x30] sm:$0xff]
        %v353 = vld [vmem:[#allocation5 + $0x38] sm:$0xff]
        %v354 = vld [vmem:[#allocation5 + $0x40] sm:$0xff]
        %v355 = vld [vmem:[#allocation5 + $0x48] sm:$0xff]
        %v356 = vld [vmem:[#allocation5 + $0x50] sm:$0xff]
        %v357 = vld [vmem:[#allocation5 + $0x58] sm:$0xff]
        %v358 = vld [vmem:[#allocation5 + $0x60] sm:$0xff]
        %v359 = vld [vmem:[#allocation5 + $0x68] sm:$0xff]
        %v360 = vld [vmem:[#allocation5 + $0x70] sm:$0xff]
        %v361 = vld [vmem:[#allocation5 + $0x78] sm:$0xff]
        %v362 = vld [vmem:[#allocation5 + $0x80] sm:$0xff]
        %v363 = vld [vmem:[#allocation5 + $0x88] sm:$0xff]
        %v364 = vld [vmem:[#allocation5 + $0x90] sm:$0xff]
        %v365 = vld [vmem:[#allocation5 + $0x98] sm:$0xff]
        %v366 = vld [vmem:[#allocation5 + $0xa0] sm:$0xff]
        %v367 = vld [vmem:[#allocation5 + $0xa8] sm:$0xff]
        %v368 = vld [vmem:[#allocation5 + $0xb0] sm:$0xff]
        %v369 = vld [vmem:[#allocation5 + $0xb8] sm:$0xff]
        %v370 = vld [vmem:[#allocation5 + $0xc0] sm:$0xff]
        %v371 = vld [vmem:[#allocation5 + $0xc8] sm:$0xff]
        %v372 = vld [vmem:[#allocation5 + $0xd0] sm:$0xff]
        %v373 = vld [vmem:[#allocation5 + $0xd8] sm:$0xff]
        %v374 = vld [vmem:[#allocation5 + $0xe0] sm:$0xff]
        %v375 = vld [vmem:[#allocation5 + $0xe8] sm:$0xff]
        %v376 = vld [vmem:[#allocation5 + $0xf0] sm:$0xff]
        %v377 = vld [vmem:[#allocation5 + $0xf8] sm:$0xff]
        %v378 = vld [vmem:[#allocation7] sm:$0x3]
        %v380 = vlaneseq
        %v381 = vshrl.u32 %v380, 7
        %v382 = vsub.s32 0, %v381
        %v383 = vrot.slane %v378, %v382
        %v384 = vlaneseq
        %v385 = vshrl.u32 %v384, 7
        %v386 = vsub.s32 1, %v385
        %v387 = vrot.slane %v378, %v386
        %390 = vmatprep.subr.mxu0 %v347
        %391 = vmatpush1.msra.mxu0 %v346
        %392 = vmatprep.subr.mxu0 %v349
        %393 = vmatpush1.msra.mxu0 %v348
        %394 = vmatprep.subr.mxu0 %v351
        %395 = vmatpush1.msra.mxu0 %v350
        %396 = vmatprep.subr.mxu0 %v353
        %397 = vmatpush1.msra.mxu0 %v352
        %398 = vmatprep.subr.mxu0 %v355
        %399 = vmatpush1.msra.mxu0 %v354
        %400 = vmatprep.subr.mxu0 %v357
        %401 = vmatpush1.msra.mxu0 %v356
        %402 = vmatprep.subr.mxu0 %v359
        %403 = vmatpush1.msra.mxu0 %v358
        %404 = vmatprep.subr.mxu0 %v361
        %405 = vmatpush1.msra.mxu0 %v360
        %406 = vmatprep.subr.mxu0 %v363
        %407 = vmatpush1.msra.mxu0 %v362
        %408 = vmatprep.subr.mxu0 %v365
        %409 = vmatpush1.msra.mxu0 %v364
        %410 = vmatprep.subr.mxu0 %v367
        %411 = vmatpush1.msra.mxu0 %v366
        %412 = vmatprep.subr.mxu0 %v369
        %413 = vmatpush1.msra.mxu0 %v368
        %414 = vmatprep.subr.mxu0 %v371
        %415 = vmatpush1.msra.mxu0 %v370
        %416 = vmatprep.subr.mxu0 %v373
        %417 = vmatpush1.msra.mxu0 %v372
        %418 = vmatprep.subr.mxu0 %v375
        %419 = vmatpush1.msra.mxu0 %v374
        %420 = vmatprep.subr.mxu0 %v377
        %421 = vmatpush1.msra.mxu0 %v376
        %422 = vmatprep.subr.mxu0 0.0
        %423 = vmatpush1.msra.mxu0 0.0
        %424 = vmatprep.subr.mxu0 0.0
        %425 = vmatpush1.msra.mxu0 0.0
        %426 = vmatprep.subr.mxu0 0.0
        %427 = vmatpush1.msra.mxu0 0.0
        %428 = vmatprep.subr.mxu0 0.0
        %429 = vmatpush1.msra.mxu0 0.0
        %430 = vmatprep.subr.mxu0 0.0
        %431 = vmatpush1.msra.mxu0 0.0
        %432 = vmatprep.subr.mxu0 0.0
        %433 = vmatpush1.msra.mxu0 0.0
        %434 = vmatprep.subr.mxu0 0.0
        %435 = vmatpush1.msra.mxu0 0.0
        %436 = vmatprep.subr.mxu0 0.0
        %437 = vmatpush1.msra.mxu0 0.0
        %438 = vmatprep.subr.mxu0 0.0
        %439 = vmatpush1.msra.mxu0 0.0
        %440 = vmatprep.subr.mxu0 0.0
        %441 = vmatpush1.msra.mxu0 0.0
        %442 = vmatprep.subr.mxu0 0.0
        %443 = vmatpush1.msra.mxu0 0.0
        %444 = vmatprep.subr.mxu0 0.0
        %445 = vmatpush1.msra.mxu0 0.0
        %446 = vmatprep.subr.mxu0 0.0
        %447 = vmatpush1.msra.mxu0 0.0
        %448 = vmatprep.subr.mxu0 0.0
        %449 = vmatpush1.msra.mxu0 0.0
        %450 = vmatprep.subr.mxu0 0.0
        %451 = vmatpush1.msra.mxu0 0.0
        %452 = vmatprep.subr.mxu0 0.0
        %453 = vmatpush1.msra.mxu0 0.0
        %454 = vmatprep.mubr.f32.mxu0 0.0
        %455 = vmatmul.mubr.f32.gmra.mrb[0].mxu0 %v218
        %v456 = vpop.f32.mrb[0].mxu0
        %v457 = vadd.f32 %v383, %v456
        %v458 = vpop.f32.mrb[0].mxu0
        %v459 = vadd.f32 %v387, %v458
        %460 = vmatprep.mubr.f32.mxu0 0.0
        %461 = vmatmul.mubr.f32.gmra.mrb[0].mxu0 %v219
        %v462 = vpop.f32.mrb[0].mxu0
        %v463 = vadd.f32 %v383, %v462
        %v464 = vpop.f32.mrb[0].mxu0
        %v465 = vadd.f32 %v387, %v464
        %466 = vmatprep.mubr.f32.mxu0 0.0
        %467 = vmatmul.mubr.f32.gmra.mrb[0].mxu0 %v220
        %v468 = vpop.f32.mrb[0].mxu0
        %v469 = vadd.f32 %v383, %v468
        %v470 = vpop.f32.mrb[0].mxu0
        %v471 = vadd.f32 %v387, %v470
        %472 = vmatprep.mubr.f32.mxu0 0.0
        %473 = vmatmul.mubr.f32.gmra.mrb[0].mxu0 %v221
        %v474 = vpop.f32.mrb[0].mxu0
        %v475 = vadd.f32 %v383, %v474
        %v476 = vpop.f32.mrb[0].mxu0
        %v477 = vadd.f32 %v387, %v476
        %478 = vmatprep.mubr.f32.mxu0 0.0
        %479 = vmatmul.mubr.f32.gmra.mrb[0].mxu0 %v222
        %v480 = vpop.f32.mrb[0].mxu0
        %v481 = vadd.f32 %v383, %v480
        %v482 = vpop.f32.mrb[0].mxu0
        %v483 = vadd.f32 %v387, %v482
        %484 = vmatprep.mubr.f32.mxu0 0.0
        %485 = vmatmul.mubr.f32.gmra.mrb[0].mxu0 %v223
        %v486 = vpop.f32.mrb[0].mxu0
        %v487 = vadd.f32 %v383, %v486
        %v488 = vpop.f32.mrb[0].mxu0
        %v489 = vadd.f32 %v387, %v488
        %490 = vmatprep.mubr.f32.mxu0 0.0
        %491 = vmatmul.mubr.f32.gmra.mrb[0].mxu0 %v224
        %v492 = vpop.f32.mrb[0].mxu0
        %v493 = vadd.f32 %v383, %v492
        %v494 = vpop.f32.mrb[0].mxu0
        %v495 = vadd.f32 %v387, %v494
        %496 = vmatprep.mubr.f32.mxu0 0.0
        %497 = vmatmul.mubr.f32.gmra.mrb[0].mxu0 %v225
        %v498 = vpop.f32.mrb[0].mxu0
        %v499 = vadd.f32 %v383, %v498
        %v500 = vpop.f32.mrb[0].mxu0
        %v501 = vadd.f32 %v387, %v500
        %502 = vmatprep.mubr.f32.mxu0 0.0
        %503 = vmatmul.mubr.f32.gmra.mrb[0].mxu0 %v226
        %v504 = vpop.f32.mrb[0].mxu0
        %v505 = vadd.f32 %v383, %v504
        %v506 = vpop.f32.mrb[0].mxu0
        %v507 = vadd.f32 %v387, %v506
        %508 = vmatprep.mubr.f32.mxu0 0.0
        %509 = vmatmul.mubr.f32.gmra.mrb[0].mxu0 %v227
        %v510 = vpop.f32.mrb[0].mxu0
        %v511 = vadd.f32 %v383, %v510
        %v512 = vpop.f32.mrb[0].mxu0
        %v513 = vadd.f32 %v387, %v512
        %514 = vmatprep.mubr.f32.mxu0 0.0
        %515 = vmatmul.mubr.f32.gmra.mrb[0].mxu0 %v228
        %v516 = vpop.f32.mrb[0].mxu0
        %v517 = vadd.f32 %v383, %v516
        %v518 = vpop.f32.mrb[0].mxu0
        %v519 = vadd.f32 %v387, %v518
        %520 = vmatprep.mubr.f32.mxu0 0.0
        %521 = vmatmul.mubr.f32.gmra.mrb[0].mxu0 %v229
        %v522 = vpop.f32.mrb[0].mxu0
        %v523 = vadd.f32 %v383, %v522
        %v524 = vpop.f32.mrb[0].mxu0
        %v525 = vadd.f32 %v387, %v524
        %526 = vmatprep.mubr.f32.mxu0 0.0
        %527 = vmatmul.mubr.f32.gmra.mrb[0].mxu0 %v230
        %v528 = vpop.f32.mrb[0].mxu0
        %v529 = vadd.f32 %v383, %v528
        %v530 = vpop.f32.mrb[0].mxu0
        %v531 = vadd.f32 %v387, %v530
        %532 = vmatprep.mubr.f32.mxu0 0.0
        %533 = vmatmul.mubr.f32.gmra.mrb[0].mxu0 %v231
        %v534 = vpop.f32.mrb[0].mxu0
        %v535 = vadd.f32 %v383, %v534
        %v536 = vpop.f32.mrb[0].mxu0
        %v537 = vadd.f32 %v387, %v536
        %538 = vmatprep.mubr.f32.mxu0 0.0
        %539 = vmatmul.mubr.f32.gmra.mrb[0].mxu0 %v232
        %v540 = vpop.f32.mrb[0].mxu0
        %v541 = vadd.f32 %v383, %v540
        %v542 = vpop.f32.mrb[0].mxu0
        %v543 = vadd.f32 %v387, %v542
        %544 = vmatprep.mubr.f32.mxu0 0.0
        %545 = vmatmul.mubr.f32.gmra.mrb[0].mxu0 %v233
        %v546 = vpop.f32.mrb[0].mxu0
        %v547 = vadd.f32 %v383, %v546
        %v548 = vpop.f32.mrb[0].mxu0
        %v549 = vadd.f32 %v387, %v548
        %550 = vmatprep.mubr.f32.mxu0 0.0
        %551 = vmatmul.mubr.f32.gmra.mrb[0].mxu0 %v234
        %v552 = vpop.f32.mrb[0].mxu0
        %v553 = vadd.f32 %v383, %v552
        %v554 = vpop.f32.mrb[0].mxu0
        %v555 = vadd.f32 %v387, %v554
        %556 = vmatprep.mubr.f32.mxu0 0.0
        %557 = vmatmul.mubr.f32.gmra.mrb[0].mxu0 %v235
        %v558 = vpop.f32.mrb[0].mxu0
        %v559 = vadd.f32 %v383, %v558
        %v560 = vpop.f32.mrb[0].mxu0
        %v561 = vadd.f32 %v387, %v560
        %562 = vmatprep.mubr.f32.mxu0 0.0
        %563 = vmatmul.mubr.f32.gmra.mrb[0].mxu0 %v236
        %v564 = vpop.f32.mrb[0].mxu0
        %v565 = vadd.f32 %v383, %v564
        %v566 = vpop.f32.mrb[0].mxu0
        %v567 = vadd.f32 %v387, %v566
        %568 = vmatprep.mubr.f32.mxu0 0.0
        %569 = vmatmul.mubr.f32.gmra.mrb[0].mxu0 %v237
        %v570 = vpop.f32.mrb[0].mxu0
        %v571 = vadd.f32 %v383, %v570
        %v572 = vpop.f32.mrb[0].mxu0
        %v573 = vadd.f32 %v387, %v572
        %574 = vmatprep.mubr.f32.mxu0 0.0
        %575 = vmatmul.mubr.f32.gmra.mrb[0].mxu0 %v238
        %v576 = vpop.f32.mrb[0].mxu0
        %v577 = vadd.f32 %v383, %v576
        %v578 = vpop.f32.mrb[0].mxu0
        %v579 = vadd.f32 %v387, %v578
        %580 = vmatprep.mubr.f32.mxu0 0.0
        %581 = vmatmul.mubr.f32.gmra.mrb[0].mxu0 %v239
        %v582 = vpop.f32.mrb[0].mxu0
        %v583 = vadd.f32 %v383, %v582
        %v584 = vpop.f32.mrb[0].mxu0
        %v585 = vadd.f32 %v387, %v584
        %586 = vmatprep.mubr.f32.mxu0 0.0
        %587 = vmatmul.mubr.f32.gmra.mrb[0].mxu0 %v240
        %v588 = vpop.f32.mrb[0].mxu0
        %v589 = vadd.f32 %v383, %v588
        %v590 = vpop.f32.mrb[0].mxu0
        %v591 = vadd.f32 %v387, %v590
        %592 = vmatprep.mubr.f32.mxu0 0.0
        %593 = vmatmul.mubr.f32.gmra.mrb[0].mxu0 %v241
        %v594 = vpop.f32.mrb[0].mxu0
        %v595 = vadd.f32 %v383, %v594
        %v596 = vpop.f32.mrb[0].mxu0
        %v597 = vadd.f32 %v387, %v596
        %598 = vmatprep.mubr.f32.mxu0 0.0
        %599 = vmatmul.mubr.f32.gmra.mrb[0].mxu0 %v242
        %v600 = vpop.f32.mrb[0].mxu0
        %v601 = vadd.f32 %v383, %v600
        %v602 = vpop.f32.mrb[0].mxu0
        %v603 = vadd.f32 %v387, %v602
        %604 = vmatprep.mubr.f32.mxu0 0.0
        %605 = vmatmul.mubr.f32.gmra.mrb[0].mxu0 %v243
        %v606 = vpop.f32.mrb[0].mxu0
        %v607 = vadd.f32 %v383, %v606
        %v608 = vpop.f32.mrb[0].mxu0
        %v609 = vadd.f32 %v387, %v608
        %610 = vmatprep.mubr.f32.mxu0 0.0
        %611 = vmatmul.mubr.f32.gmra.mrb[0].mxu0 %v244
        %v612 = vpop.f32.mrb[0].mxu0
        %v613 = vadd.f32 %v383, %v612
        %v614 = vpop.f32.mrb[0].mxu0
        %v615 = vadd.f32 %v387, %v614
        %616 = vmatprep.mubr.f32.mxu0 0.0
        %617 = vmatmul.mubr.f32.gmra.mrb[0].mxu0 %v245
        %v618 = vpop.f32.mrb[0].mxu0
        %v619 = vadd.f32 %v383, %v618
        %v620 = vpop.f32.mrb[0].mxu0
        %v621 = vadd.f32 %v387, %v620
        %622 = vmatprep.mubr.f32.mxu0 0.0
        %623 = vmatmul.mubr.f32.gmra.mrb[0].mxu0 %v246
        %v624 = vpop.f32.mrb[0].mxu0
        %v625 = vadd.f32 %v383, %v624
        %v626 = vpop.f32.mrb[0].mxu0
        %v627 = vadd.f32 %v387, %v626
        %628 = vmatprep.mubr.f32.mxu0 0.0
        %629 = vmatmul.mubr.f32.gmra.mrb[0].mxu0 %v247
        %v630 = vpop.f32.mrb[0].mxu0
        %v631 = vadd.f32 %v383, %v630
        %v632 = vpop.f32.mrb[0].mxu0
        %v633 = vadd.f32 %v387, %v632
        %634 = vmatprep.mubr.f32.mxu0 0.0
        %635 = vmatmul.mubr.f32.gmra.mrb[0].mxu0 %v248
        %v636 = vpop.f32.mrb[0].mxu0
        %v637 = vadd.f32 %v383, %v636
        %v638 = vpop.f32.mrb[0].mxu0
        %v639 = vadd.f32 %v387, %v638
        %640 = vmatprep.mubr.f32.mxu0 0.0
        %641 = vmatmul.mubr.f32.gmra.mrb[0].mxu0 %v249
        %v642 = vpop.f32.mrb[0].mxu0
        %v643 = vadd.f32 %v383, %v642
        %v644 = vpop.f32.mrb[0].mxu0
        %v645 = vadd.f32 %v387, %v644
        %646 = vmatprep.mubr.f32.mxu0 0.0
        %647 = vmatmul.mubr.f32.gmra.mrb[0].mxu0 %v250
        %v648 = vpop.f32.mrb[0].mxu0
        %v649 = vadd.f32 %v383, %v648
        %v650 = vpop.f32.mrb[0].mxu0
        %v651 = vadd.f32 %v387, %v650
        %652 = vmatprep.mubr.f32.mxu0 0.0
        %653 = vmatmul.mubr.f32.gmra.mrb[0].mxu0 %v251
        %v654 = vpop.f32.mrb[0].mxu0
        %v655 = vadd.f32 %v383, %v654
        %v656 = vpop.f32.mrb[0].mxu0
        %v657 = vadd.f32 %v387, %v656
        %658 = vmatprep.mubr.f32.mxu0 0.0
        %659 = vmatmul.mubr.f32.gmra.mrb[0].mxu0 %v252
        %v660 = vpop.f32.mrb[0].mxu0
        %v661 = vadd.f32 %v383, %v660
        %v662 = vpop.f32.mrb[0].mxu0
        %v663 = vadd.f32 %v387, %v662
        %664 = vmatprep.mubr.f32.mxu0 0.0
        %665 = vmatmul.mubr.f32.gmra.mrb[0].mxu0 %v253
        %v666 = vpop.f32.mrb[0].mxu0
        %v667 = vadd.f32 %v383, %v666
        %v668 = vpop.f32.mrb[0].mxu0
        %v669 = vadd.f32 %v387, %v668
        %670 = vmatprep.mubr.f32.mxu0 0.0
        %671 = vmatmul.mubr.f32.gmra.mrb[0].mxu0 %v254
        %v672 = vpop.f32.mrb[0].mxu0
        %v673 = vadd.f32 %v383, %v672
        %v674 = vpop.f32.mrb[0].mxu0
        %v675 = vadd.f32 %v387, %v674
        %676 = vmatprep.mubr.f32.mxu0 0.0
        %677 = vmatmul.mubr.f32.gmra.mrb[0].mxu0 %v255
        %v678 = vpop.f32.mrb[0].mxu0
        %v679 = vadd.f32 %v383, %v678
        %v680 = vpop.f32.mrb[0].mxu0
        %v681 = vadd.f32 %v387, %v680
        %682 = vmatprep.mubr.f32.mxu0 0.0
        %683 = vmatmul.mubr.f32.gmra.mrb[0].mxu0 %v256
        %v684 = vpop.f32.mrb[0].mxu0
        %v685 = vadd.f32 %v383, %v684
        %v686 = vpop.f32.mrb[0].mxu0
        %v687 = vadd.f32 %v387, %v686
        %688 = vmatprep.mubr.f32.mxu0 0.0
        %689 = vmatmul.mubr.f32.gmra.mrb[0].mxu0 %v257
        %v690 = vpop.f32.mrb[0].mxu0
        %v691 = vadd.f32 %v383, %v690
        %v692 = vpop.f32.mrb[0].mxu0
        %v693 = vadd.f32 %v387, %v692
        %694 = vmatprep.mubr.f32.mxu0 0.0
        %695 = vmatmul.mubr.f32.gmra.mrb[0].mxu0 %v258
        %v696 = vpop.f32.mrb[0].mxu0
        %v697 = vadd.f32 %v383, %v696
        %v698 = vpop.f32.mrb[0].mxu0
        %v699 = vadd.f32 %v387, %v698
        %700 = vmatprep.mubr.f32.mxu0 0.0
        %701 = vmatmul.mubr.f32.gmra.mrb[0].mxu0 %v259
        %v702 = vpop.f32.mrb[0].mxu0
        %v703 = vadd.f32 %v383, %v702
        %v704 = vpop.f32.mrb[0].mxu0
        %v705 = vadd.f32 %v387, %v704
        %706 = vmatprep.mubr.f32.mxu0 0.0
        %707 = vmatmul.mubr.f32.gmra.mrb[0].mxu0 %v260
        %v708 = vpop.f32.mrb[0].mxu0
        %v709 = vadd.f32 %v383, %v708
        %v710 = vpop.f32.mrb[0].mxu0
        %v711 = vadd.f32 %v387, %v710
        %712 = vmatprep.mubr.f32.mxu0 0.0
        %713 = vmatmul.mubr.f32.gmra.mrb[0].mxu0 %v261
        %v714 = vpop.f32.mrb[0].mxu0
        %v715 = vadd.f32 %v383, %v714
        %v716 = vpop.f32.mrb[0].mxu0
        %v717 = vadd.f32 %v387, %v716
        %718 = vmatprep.mubr.f32.mxu0 0.0
        %719 = vmatmul.mubr.f32.gmra.mrb[0].mxu0 %v262
        %v720 = vpop.f32.mrb[0].mxu0
        %v721 = vadd.f32 %v383, %v720
        %v722 = vpop.f32.mrb[0].mxu0
        %v723 = vadd.f32 %v387, %v722
        %724 = vmatprep.mubr.f32.mxu0 0.0
        %725 = vmatmul.mubr.f32.gmra.mrb[0].mxu0 %v263
        %v726 = vpop.f32.mrb[0].mxu0
        %v727 = vadd.f32 %v383, %v726
        %v728 = vpop.f32.mrb[0].mxu0
        %v729 = vadd.f32 %v387, %v728
        %730 = vmatprep.mubr.f32.mxu0 0.0
        %731 = vmatmul.mubr.f32.gmra.mrb[0].mxu0 %v264
        %v732 = vpop.f32.mrb[0].mxu0
        %v733 = vadd.f32 %v383, %v732
        %v734 = vpop.f32.mrb[0].mxu0
        %v735 = vadd.f32 %v387, %v734
        %736 = vmatprep.mubr.f32.mxu0 0.0
        %737 = vmatmul.mubr.f32.gmra.mrb[0].mxu0 %v265
        %v738 = vpop.f32.mrb[0].mxu0
        %v739 = vadd.f32 %v383, %v738
        %v740 = vpop.f32.mrb[0].mxu0
        %v741 = vadd.f32 %v387, %v740
        %742 = vmatprep.mubr.f32.mxu0 0.0
        %743 = vmatmul.mubr.f32.gmra.mrb[0].mxu0 %v266
        %v744 = vpop.f32.mrb[0].mxu0
        %v745 = vadd.f32 %v383, %v744
        %v746 = vpop.f32.mrb[0].mxu0
        %v747 = vadd.f32 %v387, %v746
        %748 = vmatprep.mubr.f32.mxu0 0.0
        %749 = vmatmul.mubr.f32.gmra.mrb[0].mxu0 %v267
        %v750 = vpop.f32.mrb[0].mxu0
        %v751 = vadd.f32 %v383, %v750
        %v752 = vpop.f32.mrb[0].mxu0
        %v753 = vadd.f32 %v387, %v752
        %754 = vmatprep.mubr.f32.mxu0 0.0
        %755 = vmatmul.mubr.f32.gmra.mrb[0].mxu0 %v268
        %v756 = vpop.f32.mrb[0].mxu0
        %v757 = vadd.f32 %v383, %v756
        %v758 = vpop.f32.mrb[0].mxu0
        %v759 = vadd.f32 %v387, %v758
        %760 = vmatprep.mubr.f32.mxu0 0.0
        %761 = vmatmul.mubr.f32.gmra.mrb[0].mxu0 %v269
        %v762 = vpop.f32.mrb[0].mxu0
        %v763 = vadd.f32 %v383, %v762
        %v764 = vpop.f32.mrb[0].mxu0
        %v765 = vadd.f32 %v387, %v764
        %766 = vmatprep.mubr.f32.mxu0 0.0
        %767 = vmatmul.mubr.f32.gmra.mrb[0].mxu0 %v270
        %v768 = vpop.f32.mrb[0].mxu0
        %v769 = vadd.f32 %v383, %v768
        %v770 = vpop.f32.mrb[0].mxu0
        %v771 = vadd.f32 %v387, %v770
        %772 = vmatprep.mubr.f32.mxu0 0.0
        %773 = vmatmul.mubr.f32.gmra.mrb[0].mxu0 %v271
        %v774 = vpop.f32.mrb[0].mxu0
        %v775 = vadd.f32 %v383, %v774
        %v776 = vpop.f32.mrb[0].mxu0
        %v777 = vadd.f32 %v387, %v776
        %778 = vmatprep.mubr.f32.mxu0 0.0
        %779 = vmatmul.mubr.f32.gmra.mrb[0].mxu0 %v272
        %v780 = vpop.f32.mrb[0].mxu0
        %v781 = vadd.f32 %v383, %v780
        %v782 = vpop.f32.mrb[0].mxu0
        %v783 = vadd.f32 %v387, %v782
        %784 = vmatprep.mubr.f32.mxu0 0.0
        %785 = vmatmul.mubr.f32.gmra.mrb[0].mxu0 %v273
        %v786 = vpop.f32.mrb[0].mxu0
        %v787 = vadd.f32 %v383, %v786
        %v788 = vpop.f32.mrb[0].mxu0
        %v789 = vadd.f32 %v387, %v788
        %790 = vmatprep.mubr.f32.mxu0 0.0
        %791 = vmatmul.mubr.f32.gmra.mrb[0].mxu0 %v274
        %v792 = vpop.f32.mrb[0].mxu0
        %v793 = vadd.f32 %v383, %v792
        %v794 = vpop.f32.mrb[0].mxu0
        %v795 = vadd.f32 %v387, %v794
        %796 = vmatprep.mubr.f32.mxu0 0.0
        %797 = vmatmul.mubr.f32.gmra.mrb[0].mxu0 %v275
        %v798 = vpop.f32.mrb[0].mxu0
        %v799 = vadd.f32 %v383, %v798
        %v800 = vpop.f32.mrb[0].mxu0
        %v801 = vadd.f32 %v387, %v800
        %802 = vmatprep.mubr.f32.mxu0 0.0
        %803 = vmatmul.mubr.f32.gmra.mrb[0].mxu0 %v276
        %v804 = vpop.f32.mrb[0].mxu0
        %v805 = vadd.f32 %v383, %v804
        %v806 = vpop.f32.mrb[0].mxu0
        %v807 = vadd.f32 %v387, %v806
        %808 = vmatprep.mubr.f32.mxu0 0.0
        %809 = vmatmul.mubr.f32.gmra.mrb[0].mxu0 %v277
        %v810 = vpop.f32.mrb[0].mxu0
        %v811 = vadd.f32 %v383, %v810
        %v812 = vpop.f32.mrb[0].mxu0
        %v813 = vadd.f32 %v387, %v812
        %814 = vmatprep.mubr.f32.mxu0 0.0
        %815 = vmatmul.mubr.f32.gmra.mrb[0].mxu0 %v278
        %v816 = vpop.f32.mrb[0].mxu0
        %v817 = vadd.f32 %v383, %v816
        %v818 = vpop.f32.mrb[0].mxu0
        %v819 = vadd.f32 %v387, %v818
        %820 = vmatprep.mubr.f32.mxu0 0.0
        %821 = vmatmul.mubr.f32.gmra.mrb[0].mxu0 %v279
        %v822 = vpop.f32.mrb[0].mxu0
        %v823 = vadd.f32 %v383, %v822
        %v824 = vpop.f32.mrb[0].mxu0
        %v825 = vadd.f32 %v387, %v824
        %826 = vmatprep.mubr.f32.mxu0 0.0
        %827 = vmatmul.mubr.f32.gmra.mrb[0].mxu0 %v280
        %v828 = vpop.f32.mrb[0].mxu0
        %v829 = vadd.f32 %v383, %v828
        %v830 = vpop.f32.mrb[0].mxu0
        %v831 = vadd.f32 %v387, %v830
        %832 = vmatprep.mubr.f32.mxu0 0.0
        %833 = vmatmul.mubr.f32.gmra.mrb[0].mxu0 %v281
        %v834 = vpop.f32.mrb[0].mxu0
        %v835 = vadd.f32 %v383, %v834
        %v836 = vpop.f32.mrb[0].mxu0
        %v837 = vadd.f32 %v387, %v836
        %838 = vmatprep.mubr.f32.mxu0 0.0
        %839 = vmatmul.mubr.f32.gmra.mrb[0].mxu0 %v282
        %v840 = vpop.f32.mrb[0].mxu0
        %v841 = vadd.f32 %v383, %v840
        %v842 = vpop.f32.mrb[0].mxu0
        %v843 = vadd.f32 %v387, %v842
        %844 = vmatprep.mubr.f32.mxu0 0.0
        %845 = vmatmul.mubr.f32.gmra.mrb[0].mxu0 %v283
        %v846 = vpop.f32.mrb[0].mxu0
        %v847 = vadd.f32 %v383, %v846
        %v848 = vpop.f32.mrb[0].mxu0
        %v849 = vadd.f32 %v387, %v848
        %850 = vmatprep.mubr.f32.mxu0 0.0
        %851 = vmatmul.mubr.f32.gmra.mrb[0].mxu0 %v284
        %v852 = vpop.f32.mrb[0].mxu0
        %v853 = vadd.f32 %v383, %v852
        %v854 = vpop.f32.mrb[0].mxu0
        %v855 = vadd.f32 %v387, %v854
        %856 = vmatprep.mubr.f32.mxu0 0.0
        %857 = vmatmul.mubr.f32.gmra.mrb[0].mxu0 %v285
        %v858 = vpop.f32.mrb[0].mxu0
        %v859 = vadd.f32 %v383, %v858
        %v860 = vpop.f32.mrb[0].mxu0
        %v861 = vadd.f32 %v387, %v860
        %862 = vmatprep.mubr.f32.mxu0 0.0
        %863 = vmatmul.mubr.f32.gmra.mrb[0].mxu0 %v286
        %v864 = vpop.f32.mrb[0].mxu0
        %v865 = vadd.f32 %v383, %v864
        %v866 = vpop.f32.mrb[0].mxu0
        %v867 = vadd.f32 %v387, %v866
        %868 = vmatprep.mubr.f32.mxu0 0.0
        %869 = vmatmul.mubr.f32.gmra.mrb[0].mxu0 %v287
        %v870 = vpop.f32.mrb[0].mxu0
        %v871 = vadd.f32 %v383, %v870
        %v872 = vpop.f32.mrb[0].mxu0
        %v873 = vadd.f32 %v387, %v872
        %874 = vmatprep.mubr.f32.mxu0 0.0
        %875 = vmatmul.mubr.f32.gmra.mrb[0].mxu0 %v288
        %v876 = vpop.f32.mrb[0].mxu0
        %v877 = vadd.f32 %v383, %v876
        %v878 = vpop.f32.mrb[0].mxu0
        %v879 = vadd.f32 %v387, %v878
        %880 = vmatprep.mubr.f32.mxu0 0.0
        %881 = vmatmul.mubr.f32.gmra.mrb[0].mxu0 %v289
        %v882 = vpop.f32.mrb[0].mxu0
        %v883 = vadd.f32 %v383, %v882
        %v884 = vpop.f32.mrb[0].mxu0
        %v885 = vadd.f32 %v387, %v884
        %886 = vmatprep.mubr.f32.mxu0 0.0
        %887 = vmatmul.mubr.f32.gmra.mrb[0].mxu0 %v290
        %v888 = vpop.f32.mrb[0].mxu0
        %v889 = vadd.f32 %v383, %v888
        %v890 = vpop.f32.mrb[0].mxu0
        %v891 = vadd.f32 %v387, %v890
        %892 = vmatprep.mubr.f32.mxu0 0.0
        %893 = vmatmul.mubr.f32.gmra.mrb[0].mxu0 %v291
        %v894 = vpop.f32.mrb[0].mxu0
        %v895 = vadd.f32 %v383, %v894
        %v896 = vpop.f32.mrb[0].mxu0
        %v897 = vadd.f32 %v387, %v896
        %898 = vmatprep.mubr.f32.mxu0 0.0
        %899 = vmatmul.mubr.f32.gmra.mrb[0].mxu0 %v292
        %v900 = vpop.f32.mrb[0].mxu0
        %v901 = vadd.f32 %v383, %v900
        %v902 = vpop.f32.mrb[0].mxu0
        %v903 = vadd.f32 %v387, %v902
        %904 = vmatprep.mubr.f32.mxu0 0.0
        %905 = vmatmul.mubr.f32.gmra.mrb[0].mxu0 %v293
        %v906 = vpop.f32.mrb[0].mxu0
        %v907 = vadd.f32 %v383, %v906
        %v908 = vpop.f32.mrb[0].mxu0
        %v909 = vadd.f32 %v387, %v908
        %910 = vmatprep.mubr.f32.mxu0 0.0
        %911 = vmatmul.mubr.f32.gmra.mrb[0].mxu0 %v294
        %v912 = vpop.f32.mrb[0].mxu0
        %v913 = vadd.f32 %v383, %v912
        %v914 = vpop.f32.mrb[0].mxu0
        %v915 = vadd.f32 %v387, %v914
        %916 = vmatprep.mubr.f32.mxu0 0.0
        %917 = vmatmul.mubr.f32.gmra.mrb[0].mxu0 %v295
        %v918 = vpop.f32.mrb[0].mxu0
        %v919 = vadd.f32 %v383, %v918
        %v920 = vpop.f32.mrb[0].mxu0
        %v921 = vadd.f32 %v387, %v920
        %922 = vmatprep.mubr.f32.mxu0 0.0
        %923 = vmatmul.mubr.f32.gmra.mrb[0].mxu0 %v296
        %v924 = vpop.f32.mrb[0].mxu0
        %v925 = vadd.f32 %v383, %v924
        %v926 = vpop.f32.mrb[0].mxu0
        %v927 = vadd.f32 %v387, %v926
        %928 = vmatprep.mubr.f32.mxu0 0.0
        %929 = vmatmul.mubr.f32.gmra.mrb[0].mxu0 %v297
        %v930 = vpop.f32.mrb[0].mxu0
        %v931 = vadd.f32 %v383, %v930
        %v932 = vpop.f32.mrb[0].mxu0
        %v933 = vadd.f32 %v387, %v932
        %934 = vmatprep.mubr.f32.mxu0 0.0
        %935 = vmatmul.mubr.f32.gmra.mrb[0].mxu0 %v298
        %v936 = vpop.f32.mrb[0].mxu0
        %v937 = vadd.f32 %v383, %v936
        %v938 = vpop.f32.mrb[0].mxu0
        %v939 = vadd.f32 %v387, %v938
        %940 = vmatprep.mubr.f32.mxu0 0.0
        %941 = vmatmul.mubr.f32.gmra.mrb[0].mxu0 %v299
        %v942 = vpop.f32.mrb[0].mxu0
        %v943 = vadd.f32 %v383, %v942
        %v944 = vpop.f32.mrb[0].mxu0
        %v945 = vadd.f32 %v387, %v944
        %946 = vmatprep.mubr.f32.mxu0 0.0
        %947 = vmatmul.mubr.f32.gmra.mrb[0].mxu0 %v300
        %v948 = vpop.f32.mrb[0].mxu0
        %v949 = vadd.f32 %v383, %v948
        %v950 = vpop.f32.mrb[0].mxu0
        %v951 = vadd.f32 %v387, %v950
        %952 = vmatprep.mubr.f32.mxu0 0.0
        %953 = vmatmul.mubr.f32.gmra.mrb[0].mxu0 %v301
        %v954 = vpop.f32.mrb[0].mxu0
        %v955 = vadd.f32 %v383, %v954
        %v956 = vpop.f32.mrb[0].mxu0
        %v957 = vadd.f32 %v387, %v956
        %958 = vmatprep.mubr.f32.mxu0 0.0
        %959 = vmatmul.mubr.f32.gmra.mrb[0].mxu0 %v302
        %v960 = vpop.f32.mrb[0].mxu0
        %v961 = vadd.f32 %v383, %v960
        %v962 = vpop.f32.mrb[0].mxu0
        %v963 = vadd.f32 %v387, %v962
        %964 = vmatprep.mubr.f32.mxu0 0.0
        %965 = vmatmul.mubr.f32.gmra.mrb[0].mxu0 %v303
        %v966 = vpop.f32.mrb[0].mxu0
        %v967 = vadd.f32 %v383, %v966
        %v968 = vpop.f32.mrb[0].mxu0
        %v969 = vadd.f32 %v387, %v968
        %970 = vmatprep.mubr.f32.mxu0 0.0
        %971 = vmatmul.mubr.f32.gmra.mrb[0].mxu0 %v304
        %v972 = vpop.f32.mrb[0].mxu0
        %v973 = vadd.f32 %v383, %v972
        %v974 = vpop.f32.mrb[0].mxu0
        %v975 = vadd.f32 %v387, %v974
        %976 = vmatprep.mubr.f32.mxu0 0.0
        %977 = vmatmul.mubr.f32.gmra.mrb[0].mxu0 %v305
        %v978 = vpop.f32.mrb[0].mxu0
        %v979 = vadd.f32 %v383, %v978
        %v980 = vpop.f32.mrb[0].mxu0
        %v981 = vadd.f32 %v387, %v980
        %982 = vmatprep.mubr.f32.mxu0 0.0
        %983 = vmatmul.mubr.f32.gmra.mrb[0].mxu0 %v306
        %v984 = vpop.f32.mrb[0].mxu0
        %v985 = vadd.f32 %v383, %v984
        %v986 = vpop.f32.mrb[0].mxu0
        %v987 = vadd.f32 %v387, %v986
        %988 = vmatprep.mubr.f32.mxu0 0.0
        %989 = vmatmul.mubr.f32.gmra.mrb[0].mxu0 %v307
        %v990 = vpop.f32.mrb[0].mxu0
        %v991 = vadd.f32 %v383, %v990
        %v992 = vpop.f32.mrb[0].mxu0
        %v993 = vadd.f32 %v387, %v992
        %994 = vmatprep.mubr.f32.mxu0 0.0
        %995 = vmatmul.mubr.f32.gmra.mrb[0].mxu0 %v308
        %v996 = vpop.f32.mrb[0].mxu0
        %v997 = vadd.f32 %v383, %v996
        %v998 = vpop.f32.mrb[0].mxu0
        %v999 = vadd.f32 %v387, %v998
        %1000 = vmatprep.mubr.f32.mxu0 0.0
        %1001 = vmatmul.mubr.f32.gmra.mrb[0].mxu0 %v309
        %v1002 = vpop.f32.mrb[0].mxu0
        %v1003 = vadd.f32 %v383, %v1002
        %v1004 = vpop.f32.mrb[0].mxu0
        %v1005 = vadd.f32 %v387, %v1004
        %1006 = vmatprep.mubr.f32.mxu0 0.0
        %1007 = vmatmul.mubr.f32.gmra.mrb[0].mxu0 %v310
        %v1008 = vpop.f32.mrb[0].mxu0
        %v1009 = vadd.f32 %v383, %v1008
        %v1010 = vpop.f32.mrb[0].mxu0
        %v1011 = vadd.f32 %v387, %v1010
        %1012 = vmatprep.mubr.f32.mxu0 0.0
        %1013 = vmatmul.mubr.f32.gmra.mrb[0].mxu0 %v311
        %v1014 = vpop.f32.mrb[0].mxu0
        %v1015 = vadd.f32 %v383, %v1014
        %v1016 = vpop.f32.mrb[0].mxu0
        %v1017 = vadd.f32 %v387, %v1016
        %1018 = vmatprep.mubr.f32.mxu0 0.0
        %1019 = vmatmul.mubr.f32.gmra.mrb[0].mxu0 %v312
        %v1020 = vpop.f32.mrb[0].mxu0
        %v1021 = vadd.f32 %v383, %v1020
        %v1022 = vpop.f32.mrb[0].mxu0
        %v1023 = vadd.f32 %v387, %v1022
        %1024 = vmatprep.mubr.f32.mxu0 0.0
        %1025 = vmatmul.mubr.f32.gmra.mrb[0].mxu0 %v313
        %v1026 = vpop.f32.mrb[0].mxu0
        %v1027 = vadd.f32 %v383, %v1026
        %v1028 = vpop.f32.mrb[0].mxu0
        %v1029 = vadd.f32 %v387, %v1028
        %1030 = vmatprep.mubr.f32.mxu0 0.0
        %1031 = vmatmul.mubr.f32.gmra.mrb[0].mxu0 %v314
        %v1032 = vpop.f32.mrb[0].mxu0
        %v1033 = vadd.f32 %v383, %v1032
        %v1034 = vpop.f32.mrb[0].mxu0
        %v1035 = vadd.f32 %v387, %v1034
        %1036 = vmatprep.mubr.f32.mxu0 0.0
        %1037 = vmatmul.mubr.f32.gmra.mrb[0].mxu0 %v315
        %v1038 = vpop.f32.mrb[0].mxu0
        %v1039 = vadd.f32 %v383, %v1038
        %v1040 = vpop.f32.mrb[0].mxu0
        %v1041 = vadd.f32 %v387, %v1040
        %1042 = vmatprep.mubr.f32.mxu0 0.0
        %1043 = vmatmul.mubr.f32.gmra.mrb[0].mxu0 %v316
        %v1044 = vpop.f32.mrb[0].mxu0
        %v1045 = vadd.f32 %v383, %v1044
        %v1046 = vpop.f32.mrb[0].mxu0
        %v1047 = vadd.f32 %v387, %v1046
        %1048 = vmatprep.mubr.f32.mxu0 0.0
        %1049 = vmatmul.mubr.f32.gmra.mrb[0].mxu0 %v317
        %v1050 = vpop.f32.mrb[0].mxu0
        %v1051 = vadd.f32 %v383, %v1050
        %v1052 = vpop.f32.mrb[0].mxu0
        %v1053 = vadd.f32 %v387, %v1052
        %1054 = vmatprep.mubr.f32.mxu0 0.0
        %1055 = vmatmul.mubr.f32.gmra.mrb[0].mxu0 %v318
        %v1056 = vpop.f32.mrb[0].mxu0
        %v1057 = vadd.f32 %v383, %v1056
        %v1058 = vpop.f32.mrb[0].mxu0
        %v1059 = vadd.f32 %v387, %v1058
        %1060 = vmatprep.mubr.f32.mxu0 0.0
        %1061 = vmatmul.mubr.f32.gmra.mrb[0].mxu0 %v319
        %v1062 = vpop.f32.mrb[0].mxu0
        %v1063 = vadd.f32 %v383, %v1062
        %v1064 = vpop.f32.mrb[0].mxu0
        %v1065 = vadd.f32 %v387, %v1064
        %1066 = vmatprep.mubr.f32.mxu0 0.0
        %1067 = vmatmul.mubr.f32.gmra.mrb[0].mxu0 %v320
        %v1068 = vpop.f32.mrb[0].mxu0
        %v1069 = vadd.f32 %v383, %v1068
        %v1070 = vpop.f32.mrb[0].mxu0
        %v1071 = vadd.f32 %v387, %v1070
        %1072 = vmatprep.mubr.f32.mxu0 0.0
        %1073 = vmatmul.mubr.f32.gmra.mrb[0].mxu0 %v321
        %v1074 = vpop.f32.mrb[0].mxu0
        %v1075 = vadd.f32 %v383, %v1074
        %v1076 = vpop.f32.mrb[0].mxu0
        %v1077 = vadd.f32 %v387, %v1076
        %1078 = vmatprep.mubr.f32.mxu0 0.0
        %1079 = vmatmul.mubr.f32.gmra.mrb[0].mxu0 %v322
        %v1080 = vpop.f32.mrb[0].mxu0
        %v1081 = vadd.f32 %v383, %v1080
        %v1082 = vpop.f32.mrb[0].mxu0
        %v1083 = vadd.f32 %v387, %v1082
        %1084 = vmatprep.mubr.f32.mxu0 0.0
        %1085 = vmatmul.mubr.f32.gmra.mrb[0].mxu0 %v323
        %v1086 = vpop.f32.mrb[0].mxu0
        %v1087 = vadd.f32 %v383, %v1086
        %v1088 = vpop.f32.mrb[0].mxu0
        %v1089 = vadd.f32 %v387, %v1088
        %1090 = vmatprep.mubr.f32.mxu0 0.0
        %1091 = vmatmul.mubr.f32.gmra.mrb[0].mxu0 %v324
        %v1092 = vpop.f32.mrb[0].mxu0
        %v1093 = vadd.f32 %v383, %v1092
        %v1094 = vpop.f32.mrb[0].mxu0
        %v1095 = vadd.f32 %v387, %v1094
        %1096 = vmatprep.mubr.f32.mxu0 0.0
        %1097 = vmatmul.mubr.f32.gmra.mrb[0].mxu0 %v325
        %v1098 = vpop.f32.mrb[0].mxu0
        %v1099 = vadd.f32 %v383, %v1098
        %v1100 = vpop.f32.mrb[0].mxu0
        %v1101 = vadd.f32 %v387, %v1100
        %1102 = vmatprep.mubr.f32.mxu0 0.0
        %1103 = vmatmul.mubr.f32.gmra.mrb[0].mxu0 %v326
        %v1104 = vpop.f32.mrb[0].mxu0
        %v1105 = vadd.f32 %v383, %v1104
        %v1106 = vpop.f32.mrb[0].mxu0
        %v1107 = vadd.f32 %v387, %v1106
        %1108 = vmatprep.mubr.f32.mxu0 0.0
        %1109 = vmatmul.mubr.f32.gmra.mrb[0].mxu0 %v327
        %v1110 = vpop.f32.mrb[0].mxu0
        %v1111 = vadd.f32 %v383, %v1110
        %v1112 = vpop.f32.mrb[0].mxu0
        %v1113 = vadd.f32 %v387, %v1112
        %1114 = vmatprep.mubr.f32.mxu0 0.0
        %1115 = vmatmul.mubr.f32.gmra.mrb[0].mxu0 %v328
        %v1116 = vpop.f32.mrb[0].mxu0
        %v1117 = vadd.f32 %v383, %v1116
        %v1118 = vpop.f32.mrb[0].mxu0
        %v1119 = vadd.f32 %v387, %v1118
        %1120 = vmatprep.mubr.f32.mxu0 0.0
        %1121 = vmatmul.mubr.f32.gmra.mrb[0].mxu0 %v329
        %v1122 = vpop.f32.mrb[0].mxu0
        %v1123 = vadd.f32 %v383, %v1122
        %v1124 = vpop.f32.mrb[0].mxu0
        %v1125 = vadd.f32 %v387, %v1124
        %1126 = vmatprep.mubr.f32.mxu0 0.0
        %1127 = vmatmul.mubr.f32.gmra.mrb[0].mxu0 %v330
        %v1128 = vpop.f32.mrb[0].mxu0
        %v1129 = vadd.f32 %v383, %v1128
        %v1130 = vpop.f32.mrb[0].mxu0
        %v1131 = vadd.f32 %v387, %v1130
        %1132 = vmatprep.mubr.f32.mxu0 0.0
        %1133 = vmatmul.mubr.f32.gmra.mrb[0].mxu0 %v331
        %v1134 = vpop.f32.mrb[0].mxu0
        %v1135 = vadd.f32 %v383, %v1134
        %v1136 = vpop.f32.mrb[0].mxu0
        %v1137 = vadd.f32 %v387, %v1136
        %1138 = vmatprep.mubr.f32.mxu0 0.0
        %1139 = vmatmul.mubr.f32.gmra.mrb[0].mxu0 %v332
        %v1140 = vpop.f32.mrb[0].mxu0
        %v1141 = vadd.f32 %v383, %v1140
        %v1142 = vpop.f32.mrb[0].mxu0
        %v1143 = vadd.f32 %v387, %v1142
        %1144 = vmatprep.mubr.f32.mxu0 0.0
        %1145 = vmatmul.mubr.f32.gmra.mrb[0].mxu0 %v333
        %v1146 = vpop.f32.mrb[0].mxu0
        %v1147 = vadd.f32 %v383, %v1146
        %v1148 = vpop.f32.mrb[0].mxu0
        %v1149 = vadd.f32 %v387, %v1148
        %1150 = vmatprep.mubr.f32.mxu0 0.0
        %1151 = vmatmul.mubr.f32.gmra.mrb[0].mxu0 %v334
        %v1152 = vpop.f32.mrb[0].mxu0
        %v1153 = vadd.f32 %v383, %v1152
        %v1154 = vpop.f32.mrb[0].mxu0
        %v1155 = vadd.f32 %v387, %v1154
        %1156 = vmatprep.mubr.f32.mxu0 0.0
        %1157 = vmatmul.mubr.f32.gmra.mrb[0].mxu0 %v335
        %v1158 = vpop.f32.mrb[0].mxu0
        %v1159 = vadd.f32 %v383, %v1158
        %v1160 = vpop.f32.mrb[0].mxu0
        %v1161 = vadd.f32 %v387, %v1160
        %1162 = vmatprep.mubr.f32.mxu0 0.0
        %1163 = vmatmul.mubr.f32.gmra.mrb[0].mxu0 %v336
        %v1164 = vpop.f32.mrb[0].mxu0
        %v1165 = vadd.f32 %v383, %v1164
        %v1166 = vpop.f32.mrb[0].mxu0
        %v1167 = vadd.f32 %v387, %v1166
        %1168 = vmatprep.mubr.f32.mxu0 0.0
        %1169 = vmatmul.mubr.f32.gmra.mrb[0].mxu0 %v337
        %v1170 = vpop.f32.mrb[0].mxu0
        %v1171 = vadd.f32 %v383, %v1170
        %v1172 = vpop.f32.mrb[0].mxu0
        %v1173 = vadd.f32 %v387, %v1172
        %1174 = vmatprep.mubr.f32.mxu0 0.0
        %1175 = vmatmul.mubr.f32.gmra.mrb[0].mxu0 %v338
        %v1176 = vpop.f32.mrb[0].mxu0
        %v1177 = vadd.f32 %v383, %v1176
        %v1178 = vpop.f32.mrb[0].mxu0
        %v1179 = vadd.f32 %v387, %v1178
        %1180 = vmatprep.mubr.f32.mxu0 0.0
        %1181 = vmatmul.mubr.f32.gmra.mrb[0].mxu0 %v339
        %v1182 = vpop.f32.mrb[0].mxu0
        %v1183 = vadd.f32 %v383, %v1182
        %v1184 = vpop.f32.mrb[0].mxu0
        %v1185 = vadd.f32 %v387, %v1184
        %1186 = vmatprep.mubr.f32.mxu0 0.0
        %1187 = vmatmul.mubr.f32.gmra.mrb[0].mxu0 %v340
        %v1188 = vpop.f32.mrb[0].mxu0
        %v1189 = vadd.f32 %v383, %v1188
        %v1190 = vpop.f32.mrb[0].mxu0
        %v1191 = vadd.f32 %v387, %v1190
        %1192 = vmatprep.mubr.f32.mxu0 0.0
        %1193 = vmatmul.mubr.f32.gmra.mrb[0].mxu0 %v341
        %v1194 = vpop.f32.mrb[0].mxu0
        %v1195 = vadd.f32 %v383, %v1194
        %v1196 = vpop.f32.mrb[0].mxu0
        %v1197 = vadd.f32 %v387, %v1196
        %1198 = vmatprep.mubr.f32.mxu0 0.0
        %1199 = vmatmul.mubr.f32.gmra.mrb[0].mxu0 %v342
        %v1200 = vpop.f32.mrb[0].mxu0
        %v1201 = vadd.f32 %v383, %v1200
        %v1202 = vpop.f32.mrb[0].mxu0
        %v1203 = vadd.f32 %v387, %v1202
        %1204 = vmatprep.mubr.f32.mxu0 0.0
        %1205 = vmatmul.mubr.f32.gmra.mrb[0].mxu0 %v343
        %v1206 = vpop.f32.mrb[0].mxu0
        %v1207 = vadd.f32 %v383, %v1206
        %v1208 = vpop.f32.mrb[0].mxu0
        %v1209 = vadd.f32 %v387, %v1208
        %1210 = vmatprep.mubr.f32.mxu0 0.0
        %1211 = vmatmul.mubr.f32.gmra.mrb[0].mxu0 %v344
        %v1212 = vpop.f32.mrb[0].mxu0
        %v1213 = vadd.f32 %v383, %v1212
        %v1214 = vpop.f32.mrb[0].mxu0
        %v1215 = vadd.f32 %v387, %v1214
        %1216 = vmatprep.mubr.f32.mxu0 0.0
        %1217 = vmatmul.mubr.f32.gmra.mrb[0].mxu0 %v345
        %v1218 = vpop.f32.mrb[0].mxu0
        %v1219 = vadd.f32 %v383, %v1218
        %v1220 = vpop.f32.mrb[0].mxu0
        %v1221 = vadd.f32 %v387, %v1220
        %1222 = vdwg.mxu0
        %1223 = vst [vmem:[%s215] sm:$0xff] %v457
        %1224 = vst [vmem:[%s215 + $0x8] sm:$0xff] %v459
        %1225 = vst [vmem:[%s215 + $0x10] sm:$0xff] %v463
        %1226 = vst [vmem:[%s215 + $0x18] sm:$0xff] %v465
        %1227 = vst [vmem:[%s215 + $0x20] sm:$0xff] %v469
        %1228 = vst [vmem:[%s215 + $0x28] sm:$0xff] %v471
        %1229 = vst [vmem:[%s215 + $0x30] sm:$0xff] %v475
        %1230 = vst [vmem:[%s215 + $0x38] sm:$0xff] %v477
        %1231 = vst [vmem:[%s215 + $0x40] sm:$0xff] %v481
        %1232 = vst [vmem:[%s215 + $0x48] sm:$0xff] %v483
        %1233 = vst [vmem:[%s215 + $0x50] sm:$0xff] %v487
        %1234 = vst [vmem:[%s215 + $0x58] sm:$0xff] %v489
        %1235 = vst [vmem:[%s215 + $0x60] sm:$0xff] %v493
        %1236 = vst [vmem:[%s215 + $0x68] sm:$0xff] %v495
        %1237 = vst [vmem:[%s215 + $0x70] sm:$0xff] %v499
        %1238 = vst [vmem:[%s215 + $0x78] sm:$0xff] %v501
        %1239 = vst [vmem:[%s215 + $0x80] sm:$0xff] %v505
        %1240 = vst [vmem:[%s215 + $0x88] sm:$0xff] %v507
        %1241 = vst [vmem:[%s215 + $0x90] sm:$0xff] %v511
        %1242 = vst [vmem:[%s215 + $0x98] sm:$0xff] %v513
        %1243 = vst [vmem:[%s215 + $0xa0] sm:$0xff] %v517
        %1244 = vst [vmem:[%s215 + $0xa8] sm:$0xff] %v519
        %1245 = vst [vmem:[%s215 + $0xb0] sm:$0xff] %v523
        %1246 = vst [vmem:[%s215 + $0xb8] sm:$0xff] %v525
        %1247 = vst [vmem:[%s215 + $0xc0] sm:$0xff] %v529
        %1248 = vst [vmem:[%s215 + $0xc8] sm:$0xff] %v531
        %1249 = vst [vmem:[%s215 + $0xd0] sm:$0xff] %v535
        %1250 = vst [vmem:[%s215 + $0xd8] sm:$0xff] %v537
        %1251 = vst [vmem:[%s215 + $0xe0] sm:$0xff] %v541
        %1252 = vst [vmem:[%s215 + $0xe8] sm:$0xff] %v543
        %1253 = vst [vmem:[%s215 + $0xf0] sm:$0xff] %v547
        %1254 = vst [vmem:[%s215 + $0xf8] sm:$0xff] %v549
        %1255 = vst [vmem:[%s215 + $0x100] sm:$0xff] %v553
        %1256 = vst [vmem:[%s215 + $0x108] sm:$0xff] %v555
        %1257 = vst [vmem:[%s215 + $0x110] sm:$0xff] %v559
        %1258 = vst [vmem:[%s215 + $0x118] sm:$0xff] %v561
        %1259 = vst [vmem:[%s215 + $0x120] sm:$0xff] %v565
        %1260 = vst [vmem:[%s215 + $0x128] sm:$0xff] %v567
        %1261 = vst [vmem:[%s215 + $0x130] sm:$0xff] %v571
        %1262 = vst [vmem:[%s215 + $0x138] sm:$0xff] %v573
        %1263 = vst [vmem:[%s215 + $0x140] sm:$0xff] %v577
        %1264 = vst [vmem:[%s215 + $0x148] sm:$0xff] %v579
        %1265 = vst [vmem:[%s215 + $0x150] sm:$0xff] %v583
        %1266 = vst [vmem:[%s215 + $0x158] sm:$0xff] %v585
        %1267 = vst [vmem:[%s215 + $0x160] sm:$0xff] %v589
        %1268 = vst [vmem:[%s215 + $0x168] sm:$0xff] %v591
        %1269 = vst [vmem:[%s215 + $0x170] sm:$0xff] %v595
        %1270 = vst [vmem:[%s215 + $0x178] sm:$0xff] %v597
        %1271 = vst [vmem:[%s215 + $0x180] sm:$0xff] %v601
        %1272 = vst [vmem:[%s215 + $0x188] sm:$0xff] %v603
        %1273 = vst [vmem:[%s215 + $0x190] sm:$0xff] %v607
        %1274 = vst [vmem:[%s215 + $0x198] sm:$0xff] %v609
        %1275 = vst [vmem:[%s215 + $0x1a0] sm:$0xff] %v613
        %1276 = vst [vmem:[%s215 + $0x1a8] sm:$0xff] %v615
        %1277 = vst [vmem:[%s215 + $0x1b0] sm:$0xff] %v619
        %1278 = vst [vmem:[%s215 + $0x1b8] sm:$0xff] %v621
        %1279 = vst [vmem:[%s215 + $0x1c0] sm:$0xff] %v625
        %1280 = vst [vmem:[%s215 + $0x1c8] sm:$0xff] %v627
        %1281 = vst [vmem:[%s215 + $0x1d0] sm:$0xff] %v631
        %1282 = vst [vmem:[%s215 + $0x1d8] sm:$0xff] %v633
        %1283 = vst [vmem:[%s215 + $0x1e0] sm:$0xff] %v637
        %1284 = vst [vmem:[%s215 + $0x1e8] sm:$0xff] %v639
        %1285 = vst [vmem:[%s215 + $0x1f0] sm:$0xff] %v643
        %1286 = vst [vmem:[%s215 + $0x1f8] sm:$0xff] %v645
        %1287 = vst [vmem:[%s215 + $0x200] sm:$0xff] %v649
        %1288 = vst [vmem:[%s215 + $0x208] sm:$0xff] %v651
        %1289 = vst [vmem:[%s215 + $0x210] sm:$0xff] %v655
        %1290 = vst [vmem:[%s215 + $0x218] sm:$0xff] %v657
        %1291 = vst [vmem:[%s215 + $0x220] sm:$0xff] %v661
        %1292 = vst [vmem:[%s215 + $0x228] sm:$0xff] %v663
        %1293 = vst [vmem:[%s215 + $0x230] sm:$0xff] %v667
        %1294 = vst [vmem:[%s215 + $0x238] sm:$0xff] %v669
        %1295 = vst [vmem:[%s215 + $0x240] sm:$0xff] %v673
        %1296 = vst [vmem:[%s215 + $0x248] sm:$0xff] %v675
        %1297 = vst [vmem:[%s215 + $0x250] sm:$0xff] %v679
        %1298 = vst [vmem:[%s215 + $0x258] sm:$0xff] %v681
        %1299 = vst [vmem:[%s215 + $0x260] sm:$0xff] %v685
        %1300 = vst [vmem:[%s215 + $0x268] sm:$0xff] %v687
        %1301 = vst [vmem:[%s215 + $0x270] sm:$0xff] %v691
        %1302 = vst [vmem:[%s215 + $0x278] sm:$0xff] %v693
        %1303 = vst [vmem:[%s215 + $0x280] sm:$0xff] %v697
        %1304 = vst [vmem:[%s215 + $0x288] sm:$0xff] %v699
        %1305 = vst [vmem:[%s215 + $0x290] sm:$0xff] %v703
        %1306 = vst [vmem:[%s215 + $0x298] sm:$0xff] %v705
        %1307 = vst [vmem:[%s215 + $0x2a0] sm:$0xff] %v709
        %1308 = vst [vmem:[%s215 + $0x2a8] sm:$0xff] %v711
        %1309 = vst [vmem:[%s215 + $0x2b0] sm:$0xff] %v715
        %1310 = vst [vmem:[%s215 + $0x2b8] sm:$0xff] %v717
        %1311 = vst [vmem:[%s215 + $0x2c0] sm:$0xff] %v721
        %1312 = vst [vmem:[%s215 + $0x2c8] sm:$0xff] %v723
        %1313 = vst [vmem:[%s215 + $0x2d0] sm:$0xff] %v727
        %1314 = vst [vmem:[%s215 + $0x2d8] sm:$0xff] %v729
        %1315 = vst [vmem:[%s215 + $0x2e0] sm:$0xff] %v733
        %1316 = vst [vmem:[%s215 + $0x2e8] sm:$0xff] %v735
        %1317 = vst [vmem:[%s215 + $0x2f0] sm:$0xff] %v739
        %1318 = vst [vmem:[%s215 + $0x2f8] sm:$0xff] %v741
        %1319 = vst [vmem:[%s215 + $0x300] sm:$0xff] %v745
        %1320 = vst [vmem:[%s215 + $0x308] sm:$0xff] %v747
        %1321 = vst [vmem:[%s215 + $0x310] sm:$0xff] %v751
        %1322 = vst [vmem:[%s215 + $0x318] sm:$0xff] %v753
        %1323 = vst [vmem:[%s215 + $0x320] sm:$0xff] %v757
        %1324 = vst [vmem:[%s215 + $0x328] sm:$0xff] %v759
        %1325 = vst [vmem:[%s215 + $0x330] sm:$0xff] %v763
        %1326 = vst [vmem:[%s215 + $0x338] sm:$0xff] %v765
        %1327 = vst [vmem:[%s215 + $0x340] sm:$0xff] %v769
        %1328 = vst [vmem:[%s215 + $0x348] sm:$0xff] %v771
        %1329 = vst [vmem:[%s215 + $0x350] sm:$0xff] %v775
        %1330 = vst [vmem:[%s215 + $0x358] sm:$0xff] %v777
        %1331 = vst [vmem:[%s215 + $0x360] sm:$0xff] %v781
        %1332 = vst [vmem:[%s215 + $0x368] sm:$0xff] %v783
        %1333 = vst [vmem:[%s215 + $0x370] sm:$0xff] %v787
        %1334 = vst [vmem:[%s215 + $0x378] sm:$0xff] %v789
        %1335 = vst [vmem:[%s215 + $0x380] sm:$0xff] %v793
        %1336 = vst [vmem:[%s215 + $0x388] sm:$0xff] %v795
        %1337 = vst [vmem:[%s215 + $0x390] sm:$0xff] %v799
        %1338 = vst [vmem:[%s215 + $0x398] sm:$0xff] %v801
        %1339 = vst [vmem:[%s215 + $0x3a0] sm:$0xff] %v805
        %1340 = vst [vmem:[%s215 + $0x3a8] sm:$0xff] %v807
        %1341 = vst [vmem:[%s215 + $0x3b0] sm:$0xff] %v811
        %1342 = vst [vmem:[%s215 + $0x3b8] sm:$0xff] %v813
        %1343 = vst [vmem:[%s215 + $0x3c0] sm:$0xff] %v817
        %1344 = vst [vmem:[%s215 + $0x3c8] sm:$0xff] %v819
        %1345 = vst [vmem:[%s215 + $0x3d0] sm:$0xff] %v823
        %1346 = vst [vmem:[%s215 + $0x3d8] sm:$0xff] %v825
        %1347 = vst [vmem:[%s215 + $0x3e0] sm:$0xff] %v829
        %1348 = vst [vmem:[%s215 + $0x3e8] sm:$0xff] %v831
        %1349 = vst [vmem:[%s215 + $0x3f0] sm:$0xff] %v835
        %1350 = vst [vmem:[%s215 + $0x3f8] sm:$0xff] %v837
        %1351 = vst [vmem:[%s215 + $0x400] sm:$0xff] %v841
        %1352 = vst [vmem:[%s215 + $0x408] sm:$0xff] %v843
        %1353 = vst [vmem:[%s215 + $0x410] sm:$0xff] %v847
        %1354 = vst [vmem:[%s215 + $0x418] sm:$0xff] %v849
        %1355 = vst [vmem:[%s215 + $0x420] sm:$0xff] %v853
        %1356 = vst [vmem:[%s215 + $0x428] sm:$0xff] %v855
        %1357 = vst [vmem:[%s215 + $0x430] sm:$0xff] %v859
        %1358 = vst [vmem:[%s215 + $0x438] sm:$0xff] %v861
        %1359 = vst [vmem:[%s215 + $0x440] sm:$0xff] %v865
        %1360 = vst [vmem:[%s215 + $0x448] sm:$0xff] %v867
        %1361 = vst [vmem:[%s215 + $0x450] sm:$0xff] %v871
        %1362 = vst [vmem:[%s215 + $0x458] sm:$0xff] %v873
        %1363 = vst [vmem:[%s215 + $0x460] sm:$0xff] %v877
        %1364 = vst [vmem:[%s215 + $0x468] sm:$0xff] %v879
        %1365 = vst [vmem:[%s215 + $0x470] sm:$0xff] %v883
        %1366 = vst [vmem:[%s215 + $0x478] sm:$0xff] %v885
        %1367 = vst [vmem:[%s215 + $0x480] sm:$0xff] %v889
        %1368 = vst [vmem:[%s215 + $0x488] sm:$0xff] %v891
        %1369 = vst [vmem:[%s215 + $0x490] sm:$0xff] %v895
        %1370 = vst [vmem:[%s215 + $0x498] sm:$0xff] %v897
        %1371 = vst [vmem:[%s215 + $0x4a0] sm:$0xff] %v901
        %1372 = vst [vmem:[%s215 + $0x4a8] sm:$0xff] %v903
        %1373 = vst [vmem:[%s215 + $0x4b0] sm:$0xff] %v907
        %1374 = vst [vmem:[%s215 + $0x4b8] sm:$0xff] %v909
        %1375 = vst [vmem:[%s215 + $0x4c0] sm:$0xff] %v913
        %1376 = vst [vmem:[%s215 + $0x4c8] sm:$0xff] %v915
        %1377 = vst [vmem:[%s215 + $0x4d0] sm:$0xff] %v919
        %1378 = vst [vmem:[%s215 + $0x4d8] sm:$0xff] %v921
        %1379 = vst [vmem:[%s215 + $0x4e0] sm:$0xff] %v925
        %1380 = vst [vmem:[%s215 + $0x4e8] sm:$0xff] %v927
        %1381 = vst [vmem:[%s215 + $0x4f0] sm:$0xff] %v931
        %1382 = vst [vmem:[%s215 + $0x4f8] sm:$0xff] %v933
        %1383 = vst [vmem:[%s215 + $0x500] sm:$0xff] %v937
        %1384 = vst [vmem:[%s215 + $0x508] sm:$0xff] %v939
        %1385 = vst [vmem:[%s215 + $0x510] sm:$0xff] %v943
        %1386 = vst [vmem:[%s215 + $0x518] sm:$0xff] %v945
        %1387 = vst [vmem:[%s215 + $0x520] sm:$0xff] %v949
        %1388 = vst [vmem:[%s215 + $0x528] sm:$0xff] %v951
        %1389 = vst [vmem:[%s215 + $0x530] sm:$0xff] %v955
        %1390 = vst [vmem:[%s215 + $0x538] sm:$0xff] %v957
        %1391 = vst [vmem:[%s215 + $0x540] sm:$0xff] %v961
        %1392 = vst [vmem:[%s215 + $0x548] sm:$0xff] %v963
        %1393 = vst [vmem:[%s215 + $0x550] sm:$0xff] %v967
        %1394 = vst [vmem:[%s215 + $0x558] sm:$0xff] %v969
        %1395 = vst [vmem:[%s215 + $0x560] sm:$0xff] %v973
        %1396 = vst [vmem:[%s215 + $0x568] sm:$0xff] %v975
        %1397 = vst [vmem:[%s215 + $0x570] sm:$0xff] %v979
        %1398 = vst [vmem:[%s215 + $0x578] sm:$0xff] %v981
        %1399 = vst [vmem:[%s215 + $0x580] sm:$0xff] %v985
        %1400 = vst [vmem:[%s215 + $0x588] sm:$0xff] %v987
        %1401 = vst [vmem:[%s215 + $0x590] sm:$0xff] %v991
        %1402 = vst [vmem:[%s215 + $0x598] sm:$0xff] %v993
        %1403 = vst [vmem:[%s215 + $0x5a0] sm:$0xff] %v997
        %1404 = vst [vmem:[%s215 + $0x5a8] sm:$0xff] %v999
        %1405 = vst [vmem:[%s215 + $0x5b0] sm:$0xff] %v1003
        %1406 = vst [vmem:[%s215 + $0x5b8] sm:$0xff] %v1005
        %1407 = vst [vmem:[%s215 + $0x5c0] sm:$0xff] %v1009
        %1408 = vst [vmem:[%s215 + $0x5c8] sm:$0xff] %v1011
        %1409 = vst [vmem:[%s215 + $0x5d0] sm:$0xff] %v1015
        %1410 = vst [vmem:[%s215 + $0x5d8] sm:$0xff] %v1017
        %1411 = vst [vmem:[%s215 + $0x5e0] sm:$0xff] %v1021
        %1412 = vst [vmem:[%s215 + $0x5e8] sm:$0xff] %v1023
        %1413 = vst [vmem:[%s215 + $0x5f0] sm:$0xff] %v1027
        %1414 = vst [vmem:[%s215 + $0x5f8] sm:$0xff] %v1029
        %1415 = vst [vmem:[%s215 + $0x600] sm:$0xff] %v1033
        %1416 = vst [vmem:[%s215 + $0x608] sm:$0xff] %v1035
        %1417 = vst [vmem:[%s215 + $0x610] sm:$0xff] %v1039
        %1418 = vst [vmem:[%s215 + $0x618] sm:$0xff] %v1041
        %1419 = vst [vmem:[%s215 + $0x620] sm:$0xff] %v1045
        %1420 = vst [vmem:[%s215 + $0x628] sm:$0xff] %v1047
        %1421 = vst [vmem:[%s215 + $0x630] sm:$0xff] %v1051
        %1422 = vst [vmem:[%s215 + $0x638] sm:$0xff] %v1053
        %1423 = vst [vmem:[%s215 + $0x640] sm:$0xff] %v1057
        %1424 = vst [vmem:[%s215 + $0x648] sm:$0xff] %v1059
        %1425 = vst [vmem:[%s215 + $0x650] sm:$0xff] %v1063
        %1426 = vst [vmem:[%s215 + $0x658] sm:$0xff] %v1065
        %1427 = vst [vmem:[%s215 + $0x660] sm:$0xff] %v1069
        %1428 = vst [vmem:[%s215 + $0x668] sm:$0xff] %v1071
        %1429 = vst [vmem:[%s215 + $0x670] sm:$0xff] %v1075
        %1430 = vst [vmem:[%s215 + $0x678] sm:$0xff] %v1077
        %1431 = vst [vmem:[%s215 + $0x680] sm:$0xff] %v1081
        %1432 = vst [vmem:[%s215 + $0x688] sm:$0xff] %v1083
        %1433 = vst [vmem:[%s215 + $0x690] sm:$0xff] %v1087
        %1434 = vst [vmem:[%s215 + $0x698] sm:$0xff] %v1089
        %1435 = vst [vmem:[%s215 + $0x6a0] sm:$0xff] %v1093
        %1436 = vst [vmem:[%s215 + $0x6a8] sm:$0xff] %v1095
        %1437 = vst [vmem:[%s215 + $0x6b0] sm:$0xff] %v1099
        %1438 = vst [vmem:[%s215 + $0x6b8] sm:$0xff] %v1101
        %1439 = vst [vmem:[%s215 + $0x6c0] sm:$0xff] %v1105
        %1440 = vst [vmem:[%s215 + $0x6c8] sm:$0xff] %v1107
        %1441 = vst [vmem:[%s215 + $0x6d0] sm:$0xff] %v1111
        %1442 = vst [vmem:[%s215 + $0x6d8] sm:$0xff] %v1113
        %1443 = vst [vmem:[%s215 + $0x6e0] sm:$0xff] %v1117
        %1444 = vst [vmem:[%s215 + $0x6e8] sm:$0xff] %v1119
        %1445 = vst [vmem:[%s215 + $0x6f0] sm:$0xff] %v1123
        %1446 = vst [vmem:[%s215 + $0x6f8] sm:$0xff] %v1125
        %1447 = vst [vmem:[%s215 + $0x700] sm:$0xff] %v1129
        %1448 = vst [vmem:[%s215 + $0x708] sm:$0xff] %v1131
        %1449 = vst [vmem:[%s215 + $0x710] sm:$0xff] %v1135
        %1450 = vst [vmem:[%s215 + $0x718] sm:$0xff] %v1137
        %1451 = vst [vmem:[%s215 + $0x720] sm:$0xff] %v1141
        %1452 = vst [vmem:[%s215 + $0x728] sm:$0xff] %v1143
        %1453 = vst [vmem:[%s215 + $0x730] sm:$0xff] %v1147
        %1454 = vst [vmem:[%s215 + $0x738] sm:$0xff] %v1149
        %1455 = vst [vmem:[%s215 + $0x740] sm:$0xff] %v1153
        %1456 = vst [vmem:[%s215 + $0x748] sm:$0xff] %v1155
        %1457 = vst [vmem:[%s215 + $0x750] sm:$0xff] %v1159
        %1458 = vst [vmem:[%s215 + $0x758] sm:$0xff] %v1161
        %1459 = vst [vmem:[%s215 + $0x760] sm:$0xff] %v1165
        %1460 = vst [vmem:[%s215 + $0x768] sm:$0xff] %v1167
        %1461 = vst [vmem:[%s215 + $0x770] sm:$0xff] %v1171
        %1462 = vst [vmem:[%s215 + $0x778] sm:$0xff] %v1173
        %1463 = vst [vmem:[%s215 + $0x780] sm:$0xff] %v1177
        %1464 = vst [vmem:[%s215 + $0x788] sm:$0xff] %v1179
        %1465 = vst [vmem:[%s215 + $0x790] sm:$0xff] %v1183
        %1466 = vst [vmem:[%s215 + $0x798] sm:$0xff] %v1185
        %1467 = vst [vmem:[%s215 + $0x7a0] sm:$0xff] %v1189
        %1468 = vst [vmem:[%s215 + $0x7a8] sm:$0xff] %v1191
        %1469 = vst [vmem:[%s215 + $0x7b0] sm:$0xff] %v1195
        %1470 = vst [vmem:[%s215 + $0x7b8] sm:$0xff] %v1197
        %1471 = vst [vmem:[%s215 + $0x7c0] sm:$0xff] %v1201
        %1472 = vst [vmem:[%s215 + $0x7c8] sm:$0xff] %v1203
        %1473 = vst [vmem:[%s215 + $0x7d0] sm:$0xff] %v1207
        %1474 = vst [vmem:[%s215 + $0x7d8] sm:$0xff] %v1209
        %1475 = vst [vmem:[%s215 + $0x7e0] sm:$0xff] %v1213
        %1476 = vst [vmem:[%s215 + $0x7e8] sm:$0xff] %v1215
        %1477 = vst [vmem:[%s215 + $0x7f0] sm:$0xff] %v1219
        %1478 = vst [vmem:[%s215 + $0x7f8] sm:$0xff] %v1221
        %s1479 = sand.u32 %s97, 1
        %s1480 = scalar_lea.sflag [#allocation4], %s1479
        %s1481 = sand.u32 %s97, 1
        %s1482 = smul.addr %s1481, 2048
        %s1483 = scalar_lea.vmem [#allocation8], %s1482
        // Predicated region
        $region45: #{tpu_custom_call.1} parent=31 // pred_check
          %p1484 = pneg %p107
        $region46: #{tpu_custom_call.1} parent=31 // pred_check_branch
          %1486 = sbr.rel (%p1484) target = $region48
        $region47: #{tpu_custom_call.1} parent=31 // pred_region
          %s1487 = smul.u32 128, %s21
          %s1489 = ssub.s32 32768, 32768
          %1490 = vsyncadd %s1480, %s1489
          %s1491 = smul.addr %s1487, 2
          %s1492 = smul.addr %s1491, 128
          %s1493 = scalar_lea.hbm %s3, %s1492
          %s1494 = sshll.u32 %s1483, 4
          %s1495 = int_to_ptr.vmem [resolvable:$true] %s1494
          %1500 = dma.vmem_to_hbm [thread:$0]  %s1495, 32768, %s1493, %s1480, 256, 256, 16
        $region48: #{tpu_custom_call.1} parent=31 // pred_fallthru
          _
      $region32: #{tpu_custom_call.1} parent=5 // pred_fallthru
        _
      %p1501 = scmp.le.s32.totalorder 2, %s16
      // Predicated region
      $region49: #{tpu_custom_call.1} parent=5 // pred_check
        %p1502 = pneg %p1501
      $region50: #{tpu_custom_call.1} parent=5 // pred_check_branch
        %1504 = sbr.rel (%p1502) target = $region52
      $region51: #{tpu_custom_call.1} parent=5 // pred_region
        %s1505 = ssub.s32 %s16, 2
        // Predicated region
        $region53: #{tpu_custom_call.1} parent=51 // pred_check
          %p1506 = pneg %p113
        $region54: #{tpu_custom_call.1} parent=51 // pred_check_branch
          %1508 = sbr.rel (%p1506) target = $region56
        $region55: #{tpu_custom_call.1} parent=51 // pred_region
          %s1509 = sand.u32 %s98, 1
          %s1510 = scalar_lea.sflag [#allocation4], %s1509
          %s1511 = sand.u32 %s98, 1
          %s1512 = smul.addr %s1511, 2048
          %s1513 = scalar_lea.vmem [#allocation8], %s1512
          %1514 = dma.done %s1510, 32768
        $region56: #{tpu_custom_call.1} parent=51 // pred_fallthru
          _
      $region52: #{tpu_custom_call.1} parent=5 // pred_fallthru
        _
    $region6: #{tpu_custom_call.1} parent=1 // loop_footer
      %s20 = sadd.s32 1, %s16
    $region7: #{tpu_custom_call.1} parent=1 // loop_footer_branch
      %15 = sbr.rel target = $region3
    $region8: #{tpu_custom_call.1} parent=1 // loop_exit
      _
    %1515 = vsyncpa [#allocation3], 1
    %s1516 = scalar_lea.sflag [#allocation3], 1
    %1517 = vsyncpa %s1516, 1
    %1518 = vsyncpa [#allocation6], 1
    %1519 = vsyncpa [#allocation4], 1
    %s1520 = scalar_lea.sflag [#allocation4], 1
    %1521 = vsyncpa %s1520, 1

</llo_original>
